<compile_context>
chip_gen: v6e
topology: v6e:2x2x1
jax: 0.10.0
libtpu: 0.0.40
codegen_flags: <defaults>
</compile_context>

<pallas_src>
import functools
import math

import numpy as np
import jax
import jax.numpy as jnp
from jax.experimental import pallas as pl
from jax.experimental.pallas import tpu as pltpu

INPUT_DIM = 4
OUTPUT_DIM = 4
LEAKY_SLOPE = 0.01          # F.leaky_relu default negative slope

IN_PAD = 128                # padded input width (lane-dense)
H0_PAD = 256                # padded width of first hidden layer (240 -> 256)
H_PAD = 128                 # padded width of all later layers (<=128 -> 128)


def _next_pow2(n):
    return 1 if n <= 1 else 1 << (int(n) - 1).bit_length()


def layer_dims(input_dim, output_dim):
    """Replicates the dims built in Actor.__init__."""
    dims = [input_dim, 60 * input_dim]
    for i in range(2, 8):
        dims.append(int(60 * input_dim / i))
    dims.append(output_dim)
    return dims   # d=4: [4, 240, 120, 80, 60, 48, 40, 34, 4]


DIMS = layer_dims(INPUT_DIM, OUTPUT_DIM)
N_LAYERS = len(DIMS) - 1    # 8


def init_params(key, input_dim, output_dim):
    """Deterministic PyTorch-Linear-style init: U(-1/sqrt(fan_in), 1/sqrt(fan_in))."""
    dims = layer_dims(input_dim, output_dim)
    params = []
    for li in range(len(dims) - 1):
        fan_in, fan_out = dims[li], dims[li + 1]
        key, kw, kb = jax.random.split(key, 3)
        bound = 1.0 / math.sqrt(fan_in)
        w = jax.random.uniform(kw, (fan_in, fan_out), jnp.float32, -bound, bound)
        b = jax.random.uniform(kb, (1, fan_out), jnp.float32, -bound, bound)
        params.append((w, b))
    return params


def pack_params(params):
    """Pack per-layer (w, b) into zero-padded two-width slabs.

    Returns (w0 [128,256] bf16, w1 [256,128] bf16, wr [6,128,128] bf16,
             b0 [1,256] f32,    br [7,1,128] f32)
    Zero padding keeps padded activation columns exactly 0 through the chain.
    """
    w0 = jnp.zeros((IN_PAD, H0_PAD), jnp.float32).at[:DIMS[0], :DIMS[1]].set(params[0][0])
    b0 = jnp.zeros((1, H0_PAD), jnp.float32).at[0, :DIMS[1]].set(params[0][1][0])
    w1 = jnp.zeros((H0_PAD, H_PAD), jnp.float32).at[:DIMS[1], :DIMS[2]].set(params[1][0])
    wr = jnp.zeros((6, H_PAD, H_PAD), jnp.float32)
    br = jnp.zeros((7, 1, H_PAD), jnp.float32).at[0, 0, :DIMS[2]].set(params[1][1][0])
    for li in range(2, 8):
        w, b = params[li]
        wr = wr.at[li - 2, :w.shape[0], :w.shape[1]].set(w)
        br = br.at[li - 1, 0, :b.shape[1]].set(b[0])
    return (w0.astype(jnp.bfloat16), w1.astype(jnp.bfloat16),
            wr.astype(jnp.bfloat16), b0, br)


# ---------------------------------------------------------------------------
# Fused Pallas kernel: per-group MLP chain + masked flattened softmax
# ---------------------------------------------------------------------------

def actor_kernel(len_ref, x_ref, w0_ref, w1_ref, wr_ref, b0_ref, br_ref, out_ref):
    """One grid step = one (padded) group.

    len_ref : SMEM int32[G_pad]        (scalar-prefetched group lengths)
    x_ref   : [1, MAX_LEN, 128] bf16   (this group's zero-padded rows)
    w0_ref  : [128, 256] bf16          (resident; constant index_map)
    w1_ref  : [256, 128] bf16
    wr_ref  : [6, 128, 128] bf16
    b0_ref  : [1, 256] f32
    br_ref  : [7, 1, 128] f32
    out_ref : [1, MAX_LEN, OUTPUT_DIM] f32  (softmax probs, zero-padded rows)
    """
    g = pl.program_id(0)
    ln = len_ref[g]

    # ---- MLP chain: bf16 operands on the MXU, f32 accumulate + f32 epilogue.
    h = jnp.dot(x_ref[0], w0_ref[...], preferred_element_type=jnp.float32)
    h = h + b0_ref[...]
    h = jnp.where(h > 0, h, LEAKY_SLOPE * h)                    # leaky_relu

    h = jnp.dot(h.astype(jnp.bfloat16), w1_ref[...],
                preferred_element_type=jnp.float32)
    h = h + br_ref[0]
    h = jnp.where(h > 0, h, LEAKY_SLOPE * h)                    # leaky_relu

    for li in range(6):                                         # layers 2..7
        h = jnp.dot(h.astype(jnp.bfloat16), wr_ref[li],
                    preferred_element_type=jnp.float32)
        h = h + br_ref[li + 1]
        if li < 5:
            h = jnp.where(h > 0, h, LEAKY_SLOPE * h)            # leaky_relu
        else:
            h = jnp.maximum(h, 0.0)                             # relu (output layer)

    # ---- Masked softmax over the flattened [ln * OUTPUT_DIM] values.
    rows = jax.lax.broadcasted_iota(jnp.int32, h.shape, 0)
    cols = jax.lax.broadcasted_iota(jnp.int32, h.shape, 1)
    valid = (rows < ln) & (cols < OUTPUT_DIM)
    neg = jnp.float32(-1e30)                  # finite mask: no -inf / NaN paths
    logits = jnp.where(valid, h, neg)
    m = jnp.max(jnp.max(logits, axis=1, keepdims=True), axis=0, keepdims=True)
    e = jnp.where(valid, jnp.exp(logits - m), 0.0)
    denom = jnp.sum(jnp.sum(e, axis=1, keepdims=True), axis=0, keepdims=True)
    denom = jnp.maximum(denom, jnp.float32(1e-30))   # guards empty (padded) groups
    p = e / denom                                    # exact division (feeds sampler)
    out_ref[0, :, :] = p[:, :OUTPUT_DIM]


@functools.lru_cache(maxsize=None)
def _build_actor_call(g_pad, max_len):
    """Build (and cache) the fused pallas_call for a (G_pad, MAX_LEN) bucket."""
    grid_spec = pltpu.PrefetchScalarGridSpec(
        num_scalar_prefetch=1,
        grid=(g_pad,),
        in_specs=[
            pl.BlockSpec((1, max_len, IN_PAD), lambda g, ln: (g, 0, 0)),
            # Weight / bias slabs: constant index_map -> resident across grid.
            pl.BlockSpec((IN_PAD, H0_PAD), lambda g, ln: (0, 0)),
            pl.BlockSpec((H0_PAD, H_PAD), lambda g, ln: (0, 0)),
            pl.BlockSpec((6, H_PAD, H_PAD), lambda g, ln: (0, 0, 0)),
            pl.BlockSpec((1, H0_PAD), lambda g, ln: (0, 0)),
            pl.BlockSpec((7, 1, H_PAD), lambda g, ln: (0, 0, 0)),
        ],
        out_specs=pl.BlockSpec((1, max_len, OUTPUT_DIM), lambda g, ln: (g, 0, 0)),
    )
    call = pl.pallas_call(
        actor_kernel,
        out_shape=jax.ShapeDtypeStruct((g_pad, max_len, OUTPUT_DIM), jnp.float32),
        grid_spec=grid_spec,
        compiler_params=pltpu.CompilerParams(
            dimension_semantics=("parallel",)),
    )
    return jax.jit(call)


# ---------------------------------------------------------------------------
# Wrappers
# ---------------------------------------------------------------------------

def actor_forward(packed_params, X_groups):
    """X_groups: list of [l_i, INPUT_DIM] arrays (the ragged nested list X).

    Returns a list of per-group softmax'd flattened outputs, like Actor.forward.
    """
    w0, w1, wr, b0, br = packed_params
    num_groups = len(X_groups)
    lengths = [int(g.shape[0]) for g in X_groups]

    # Bucketed shapes -> the compiled callable is reused across ragged batches.
    max_len = max(8, _next_pow2(max(lengths)))
    g_pad = max(2, _next_pow2(num_groups))      # >=2 grid steps (v7x megacore)

    # TODO(synk): ragged nested-list -> padded [G_pad, MAX_LEN, 128] packing and
    # the final per-group list split are host-side shape bookkeeping, not kernel work.
    xg = np.zeros((g_pad, max_len, IN_PAD), np.float32)
    for g, arr in enumerate(X_groups):
        a = np.asarray(arr, np.float32)
        xg[g, :a.shape[0], :a.shape[1]] = a
    xg = jnp.asarray(xg, jnp.bfloat16)          # lane-dense bf16 input slab
    len_arr = jnp.asarray(
        np.array(lengths + [0] * (g_pad - num_groups), np.int32))

    call = _build_actor_call(g_pad, max_len)
    probs = call(len_arr, xg, w0, w1, wr, b0, br)   # [G_pad, MAX_LEN, OUTPUT_DIM]

    return [probs[g, :lengths[g], :].reshape(-1) for g in range(num_groups)]


def actor_forward_ref(params, X_groups):
    """Pure-JAX f32 reference matching the PyTorch module."""
    x = jnp.concatenate([jnp.asarray(a, jnp.float32) for a in X_groups], axis=0)
    h = x
    for li, (w, b) in enumerate(params):
        h = h @ w + b
        if li < len(params) - 1:
            h = jnp.where(h > 0, h, LEAKY_SLOPE * h)
        else:
            h = jnp.maximum(h, 0.0)
    out, c = [], 0
    for garr in X_groups:
        l = garr.shape[0]
        out.append(jax.nn.softmax(h[c:c + l].reshape(-1)))
        c += l
    return out


# ---------------------------------------------------------------------------
# Main
# ---------------------------------------------------------------------------

if __name__ == "__main__":
    key = jax.random.PRNGKey(0)
    k_params, k_x0, k_x1 = jax.random.split(key, 3)

    params = init_params(k_params, INPUT_DIM, OUTPUT_DIM)
    packed = pack_params(params)

    # Ragged "nested list" input X: two groups of lengths 3 and 5.
    X_groups = [
        jax.random.normal(k_x0, (3, INPUT_DIM), jnp.float32),
        jax.random.normal(k_x1, (5, INPUT_DIM), jnp.float32),
    ]

    out = actor_forward(packed, X_groups)
    out = [jax.block_until_ready(o) for o in out]
    ref = actor_forward_ref(params, X_groups)

    # sanity checks: shapes, softmax normalization, match f32 reference
    assert out[0].shape == (3 * OUTPUT_DIM,)
    assert out[1].shape == (5 * OUTPUT_DIM,)
    for o, r in zip(out, ref):
        assert abs(float(jnp.sum(o)) - 1.0) < 1e-3          # exact-divide softmax
        assert float(jnp.max(jnp.abs(o - r))) < 5e-2        # bf16 matmul tolerance

    print("KERNEL_OK")
</pallas_src>

<mosaic_0001>
module attributes {stable_mosaic.version = 11 : i64} {
  func.func @actor_kernel(%arg0: i32, %arg1: memref<2xi32, #tpu.memory_space<smem>>, %arg2: memref<1x8x128xbf16, #tpu.memory_space<vmem>>, %arg3: memref<128x256xbf16, #tpu.memory_space<vmem>>, %arg4: memref<256x128xbf16, #tpu.memory_space<vmem>>, %arg5: memref<6x128x128xbf16, #tpu.memory_space<vmem>>, %arg6: memref<1x256xf32, #tpu.memory_space<vmem>>, %arg7: memref<7x1x128xf32, #tpu.memory_space<vmem>>, %arg8: memref<1x8x4xf32, #tpu.memory_space<vmem>>) attributes {dimension_semantics = [#tpu.dimension_semantics<parallel>], iteration_bounds = array<i64: 2>, scalar_prefetch = 1 : i64, scratch_operands = 0 : i64, tpu.core_type = #tpu.core_type<tc>, window_params = [{transform_indices = @transform_0, window_bounds = array<i64: 1, 8, 128>}, {pipeline_mode = #tpu.pipeline_mode<synchronous>, transform_indices = @transform_1, window_bounds = array<i64: 128, 256>}, {pipeline_mode = #tpu.pipeline_mode<synchronous>, transform_indices = @transform_2, window_bounds = array<i64: 256, 128>}, {pipeline_mode = #tpu.pipeline_mode<synchronous>, transform_indices = @transform_3, window_bounds = array<i64: 6, 128, 128>}, {pipeline_mode = #tpu.pipeline_mode<synchronous>, transform_indices = @transform_4, window_bounds = array<i64: 1, 256>}, {pipeline_mode = #tpu.pipeline_mode<synchronous>, transform_indices = @transform_5, window_bounds = array<i64: 7, 1, 128>}, {transform_indices = @transform_6, window_bounds = array<i64: 1, 8, 4>}]} {
    %0 = arith.index_cast %arg0 : i32 to index
    %1 = memref.load %arg1[%0] : memref<2xi32, #tpu.memory_space<smem>>
    %c0 = arith.constant 0 : index
    %c0_0 = arith.constant 0 : index
    %c0_1 = arith.constant 0 : index
    %2 = vector.load %arg2[%c0, %c0_0, %c0_1] : memref<1x8x128xbf16, #tpu.memory_space<vmem>>, vector<1x8x128xbf16>
    %3 = vector.shape_cast %2 : vector<1x8x128xbf16> to vector<8x128xbf16>
    %c0_2 = arith.constant 0 : index
    %c0_3 = arith.constant 0 : index
    %4 = vector.load %arg3[%c0_2, %c0_3] : memref<128x256xbf16, #tpu.memory_space<vmem>>, vector<128x256xbf16>
    %cst = arith.constant dense<0.000000e+00> : vector<8x256xf32>
    %5 = tpu.matmul %3, %4, %cst {dimension_numbers = #tpu.dot_dimension_numbers<[1], [0], [0], [1], [0, 0, 1, 1], [], []>} : vector<8x128xbf16>, vector<128x256xbf16>, vector<8x256xf32> -> vector<8x256xf32>
    %c0_4 = arith.constant 0 : index
    %c0_5 = arith.constant 0 : index
    %6 = vector.load %arg6[%c0_4, %c0_5] : memref<1x256xf32, #tpu.memory_space<vmem>>, vector<1x256xf32>
    %7 = vector.broadcast %6 : vector<1x256xf32> to vector<8x256xf32>
    %8 = arith.addf %5, %7 : vector<8x256xf32>
    %cst_6 = arith.constant 0.000000e+00 : f32
    %9 = vector.broadcast %cst_6 : f32 to vector<8x256xf32>
    %10 = arith.cmpf ogt, %8, %9 : vector<8x256xf32>
    %cst_7 = arith.constant 0.00999999977 : f32
    %11 = vector.broadcast %cst_7 : f32 to vector<8x256xf32>
    %12 = arith.mulf %11, %8 : vector<8x256xf32>
    %13 = arith.select %10, %8, %12 : vector<8x256xi1>, vector<8x256xf32>
    %14 = arith.truncf %13 : vector<8x256xf32> to vector<8x256xbf16>
    %c0_8 = arith.constant 0 : index
    %c0_9 = arith.constant 0 : index
    %15 = vector.load %arg4[%c0_8, %c0_9] : memref<256x128xbf16, #tpu.memory_space<vmem>>, vector<256x128xbf16>
    %cst_10 = arith.constant dense<0.000000e+00> : vector<8x128xf32>
    %16 = tpu.matmul %14, %15, %cst_10 {dimension_numbers = #tpu.dot_dimension_numbers<[1], [0], [0], [1], [0, 0, 1, 1], [], []>} : vector<8x256xbf16>, vector<256x128xbf16>, vector<8x128xf32> -> vector<8x128xf32>
    %c0_11 = arith.constant 0 : index
    %c0_12 = arith.constant 0 : index
    %c0_13 = arith.constant 0 : index
    %17 = vector.load %arg7[%c0_11, %c0_12, %c0_13] : memref<7x1x128xf32, #tpu.memory_space<vmem>>, vector<1x1x128xf32>
    %18 = vector.shape_cast %17 : vector<1x1x128xf32> to vector<1x128xf32>
    %19 = vector.broadcast %18 : vector<1x128xf32> to vector<8x128xf32>
    %20 = arith.addf %16, %19 : vector<8x128xf32>
    %cst_14 = arith.constant 0.000000e+00 : f32
    %21 = vector.broadcast %cst_14 : f32 to vector<8x128xf32>
    %22 = arith.cmpf ogt, %20, %21 : vector<8x128xf32>
    %cst_15 = arith.constant 0.00999999977 : f32
    %23 = vector.broadcast %cst_15 : f32 to vector<8x128xf32>
    %24 = arith.mulf %23, %20 : vector<8x128xf32>
    %25 = arith.select %22, %20, %24 : vector<8x128xi1>, vector<8x128xf32>
    %26 = arith.truncf %25 : vector<8x128xf32> to vector<8x128xbf16>
    %c0_16 = arith.constant 0 : index
    %c0_17 = arith.constant 0 : index
    %c0_18 = arith.constant 0 : index
    %27 = vector.load %arg5[%c0_16, %c0_17, %c0_18] : memref<6x128x128xbf16, #tpu.memory_space<vmem>>, vector<1x128x128xbf16>
    %28 = vector.shape_cast %27 : vector<1x128x128xbf16> to vector<128x128xbf16>
    %cst_19 = arith.constant dense<0.000000e+00> : vector<8x128xf32>
    %29 = tpu.matmul %26, %28, %cst_19 {dimension_numbers = #tpu.dot_dimension_numbers<[1], [0], [0], [1], [0, 0, 1, 1], [], []>} : vector<8x128xbf16>, vector<128x128xbf16>, vector<8x128xf32> -> vector<8x128xf32>
    %c1 = arith.constant 1 : index
    %c0_20 = arith.constant 0 : index
    %c0_21 = arith.constant 0 : index
    %30 = vector.load %arg7[%c1, %c0_20, %c0_21] : memref<7x1x128xf32, #tpu.memory_space<vmem>>, vector<1x1x128xf32>
    %31 = vector.shape_cast %30 : vector<1x1x128xf32> to vector<1x128xf32>
    %32 = vector.broadcast %31 : vector<1x128xf32> to vector<8x128xf32>
    %33 = arith.addf %29, %32 : vector<8x128xf32>
    %cst_22 = arith.constant 0.000000e+00 : f32
    %34 = vector.broadcast %cst_22 : f32 to vector<8x128xf32>
    %35 = arith.cmpf ogt, %33, %34 : vector<8x128xf32>
    %cst_23 = arith.constant 0.00999999977 : f32
    %36 = vector.broadcast %cst_23 : f32 to vector<8x128xf32>
    %37 = arith.mulf %36, %33 : vector<8x128xf32>
    %38 = arith.select %35, %33, %37 : vector<8x128xi1>, vector<8x128xf32>
    %39 = arith.truncf %38 : vector<8x128xf32> to vector<8x128xbf16>
    %c1_24 = arith.constant 1 : index
    %c0_25 = arith.constant 0 : index
    %c0_26 = arith.constant 0 : index
    %40 = vector.load %arg5[%c1_24, %c0_25, %c0_26] : memref<6x128x128xbf16, #tpu.memory_space<vmem>>, vector<1x128x128xbf16>
    %41 = vector.shape_cast %40 : vector<1x128x128xbf16> to vector<128x128xbf16>
    %cst_27 = arith.constant dense<0.000000e+00> : vector<8x128xf32>
    %42 = tpu.matmul %39, %41, %cst_27 {dimension_numbers = #tpu.dot_dimension_numbers<[1], [0], [0], [1], [0, 0, 1, 1], [], []>} : vector<8x128xbf16>, vector<128x128xbf16>, vector<8x128xf32> -> vector<8x128xf32>
    %c2 = arith.constant 2 : index
    %c0_28 = arith.constant 0 : index
    %c0_29 = arith.constant 0 : index
    %43 = vector.load %arg7[%c2, %c0_28, %c0_29] : memref<7x1x128xf32, #tpu.memory_space<vmem>>, vector<1x1x128xf32>
    %44 = vector.shape_cast %43 : vector<1x1x128xf32> to vector<1x128xf32>
    %45 = vector.broadcast %44 : vector<1x128xf32> to vector<8x128xf32>
    %46 = arith.addf %42, %45 : vector<8x128xf32>
    %cst_30 = arith.constant 0.000000e+00 : f32
    %47 = vector.broadcast %cst_30 : f32 to vector<8x128xf32>
    %48 = arith.cmpf ogt, %46, %47 : vector<8x128xf32>
    %cst_31 = arith.constant 0.00999999977 : f32
    %49 = vector.broadcast %cst_31 : f32 to vector<8x128xf32>
    %50 = arith.mulf %49, %46 : vector<8x128xf32>
    %51 = arith.select %48, %46, %50 : vector<8x128xi1>, vector<8x128xf32>
    %52 = arith.truncf %51 : vector<8x128xf32> to vector<8x128xbf16>
    %c2_32 = arith.constant 2 : index
    %c0_33 = arith.constant 0 : index
    %c0_34 = arith.constant 0 : index
    %53 = vector.load %arg5[%c2_32, %c0_33, %c0_34] : memref<6x128x128xbf16, #tpu.memory_space<vmem>>, vector<1x128x128xbf16>
    %54 = vector.shape_cast %53 : vector<1x128x128xbf16> to vector<128x128xbf16>
    %cst_35 = arith.constant dense<0.000000e+00> : vector<8x128xf32>
    %55 = tpu.matmul %52, %54, %cst_35 {dimension_numbers = #tpu.dot_dimension_numbers<[1], [0], [0], [1], [0, 0, 1, 1], [], []>} : vector<8x128xbf16>, vector<128x128xbf16>, vector<8x128xf32> -> vector<8x128xf32>
    %c3 = arith.constant 3 : index
    %c0_36 = arith.constant 0 : index
    %c0_37 = arith.constant 0 : index
    %56 = vector.load %arg7[%c3, %c0_36, %c0_37] : memref<7x1x128xf32, #tpu.memory_space<vmem>>, vector<1x1x128xf32>
    %57 = vector.shape_cast %56 : vector<1x1x128xf32> to vector<1x128xf32>
    %58 = vector.broadcast %57 : vector<1x128xf32> to vector<8x128xf32>
    %59 = arith.addf %55, %58 : vector<8x128xf32>
    %cst_38 = arith.constant 0.000000e+00 : f32
    %60 = vector.broadcast %cst_38 : f32 to vector<8x128xf32>
    %61 = arith.cmpf ogt, %59, %60 : vector<8x128xf32>
    %cst_39 = arith.constant 0.00999999977 : f32
    %62 = vector.broadcast %cst_39 : f32 to vector<8x128xf32>
    %63 = arith.mulf %62, %59 : vector<8x128xf32>
    %64 = arith.select %61, %59, %63 : vector<8x128xi1>, vector<8x128xf32>
    %65 = arith.truncf %64 : vector<8x128xf32> to vector<8x128xbf16>
    %c3_40 = arith.constant 3 : index
    %c0_41 = arith.constant 0 : index
    %c0_42 = arith.constant 0 : index
    %66 = vector.load %arg5[%c3_40, %c0_41, %c0_42] : memref<6x128x128xbf16, #tpu.memory_space<vmem>>, vector<1x128x128xbf16>
    %67 = vector.shape_cast %66 : vector<1x128x128xbf16> to vector<128x128xbf16>
    %cst_43 = arith.constant dense<0.000000e+00> : vector<8x128xf32>
    %68 = tpu.matmul %65, %67, %cst_43 {dimension_numbers = #tpu.dot_dimension_numbers<[1], [0], [0], [1], [0, 0, 1, 1], [], []>} : vector<8x128xbf16>, vector<128x128xbf16>, vector<8x128xf32> -> vector<8x128xf32>
    %c4 = arith.constant 4 : index
    %c0_44 = arith.constant 0 : index
    %c0_45 = arith.constant 0 : index
    %69 = vector.load %arg7[%c4, %c0_44, %c0_45] : memref<7x1x128xf32, #tpu.memory_space<vmem>>, vector<1x1x128xf32>
    %70 = vector.shape_cast %69 : vector<1x1x128xf32> to vector<1x128xf32>
    %71 = vector.broadcast %70 : vector<1x128xf32> to vector<8x128xf32>
    %72 = arith.addf %68, %71 : vector<8x128xf32>
    %cst_46 = arith.constant 0.000000e+00 : f32
    %73 = vector.broadcast %cst_46 : f32 to vector<8x128xf32>
    %74 = arith.cmpf ogt, %72, %73 : vector<8x128xf32>
    %cst_47 = arith.constant 0.00999999977 : f32
    %75 = vector.broadcast %cst_47 : f32 to vector<8x128xf32>
    %76 = arith.mulf %75, %72 : vector<8x128xf32>
    %77 = arith.select %74, %72, %76 : vector<8x128xi1>, vector<8x128xf32>
    %78 = arith.truncf %77 : vector<8x128xf32> to vector<8x128xbf16>
    %c4_48 = arith.constant 4 : index
    %c0_49 = arith.constant 0 : index
    %c0_50 = arith.constant 0 : index
    %79 = vector.load %arg5[%c4_48, %c0_49, %c0_50] : memref<6x128x128xbf16, #tpu.memory_space<vmem>>, vector<1x128x128xbf16>
    %80 = vector.shape_cast %79 : vector<1x128x128xbf16> to vector<128x128xbf16>
    %cst_51 = arith.constant dense<0.000000e+00> : vector<8x128xf32>
    %81 = tpu.matmul %78, %80, %cst_51 {dimension_numbers = #tpu.dot_dimension_numbers<[1], [0], [0], [1], [0, 0, 1, 1], [], []>} : vector<8x128xbf16>, vector<128x128xbf16>, vector<8x128xf32> -> vector<8x128xf32>
    %c5 = arith.constant 5 : index
    %c0_52 = arith.constant 0 : index
    %c0_53 = arith.constant 0 : index
    %82 = vector.load %arg7[%c5, %c0_52, %c0_53] : memref<7x1x128xf32, #tpu.memory_space<vmem>>, vector<1x1x128xf32>
    %83 = vector.shape_cast %82 : vector<1x1x128xf32> to vector<1x128xf32>
    %84 = vector.broadcast %83 : vector<1x128xf32> to vector<8x128xf32>
    %85 = arith.addf %81, %84 : vector<8x128xf32>
    %cst_54 = arith.constant 0.000000e+00 : f32
    %86 = vector.broadcast %cst_54 : f32 to vector<8x128xf32>
    %87 = arith.cmpf ogt, %85, %86 : vector<8x128xf32>
    %cst_55 = arith.constant 0.00999999977 : f32
    %88 = vector.broadcast %cst_55 : f32 to vector<8x128xf32>
    %89 = arith.mulf %88, %85 : vector<8x128xf32>
    %90 = arith.select %87, %85, %89 : vector<8x128xi1>, vector<8x128xf32>
    %91 = arith.truncf %90 : vector<8x128xf32> to vector<8x128xbf16>
    %c5_56 = arith.constant 5 : index
    %c0_57 = arith.constant 0 : index
    %c0_58 = arith.constant 0 : index
    %92 = vector.load %arg5[%c5_56, %c0_57, %c0_58] : memref<6x128x128xbf16, #tpu.memory_space<vmem>>, vector<1x128x128xbf16>
    %93 = vector.shape_cast %92 : vector<1x128x128xbf16> to vector<128x128xbf16>
    %cst_59 = arith.constant dense<0.000000e+00> : vector<8x128xf32>
    %94 = tpu.matmul %91, %93, %cst_59 {dimension_numbers = #tpu.dot_dimension_numbers<[1], [0], [0], [1], [0, 0, 1, 1], [], []>} : vector<8x128xbf16>, vector<128x128xbf16>, vector<8x128xf32> -> vector<8x128xf32>
    %c6 = arith.constant 6 : index
    %c0_60 = arith.constant 0 : index
    %c0_61 = arith.constant 0 : index
    %95 = vector.load %arg7[%c6, %c0_60, %c0_61] : memref<7x1x128xf32, #tpu.memory_space<vmem>>, vector<1x1x128xf32>
    %96 = vector.shape_cast %95 : vector<1x1x128xf32> to vector<1x128xf32>
    %97 = vector.broadcast %96 : vector<1x128xf32> to vector<8x128xf32>
    %98 = arith.addf %94, %97 : vector<8x128xf32>
    %cst_62 = arith.constant 0.000000e+00 : f32
    %99 = vector.broadcast %cst_62 : f32 to vector<8x128xf32>
    %100 = arith.maximumf %98, %99 : vector<8x128xf32>
    %101 = tpu.iota {dimensions = array<i32: 0>} : vector<8x128xi32>
    %102 = tpu.iota {dimensions = array<i32: 1>} : vector<8x128xi32>
    %103 = vector.broadcast %1 : i32 to vector<8x128xi32>
    %104 = arith.cmpi slt, %101, %103 : vector<8x128xi32>
    %c4_i32 = arith.constant 4 : i32
    %105 = vector.broadcast %c4_i32 : i32 to vector<8x128xi32>
    %106 = arith.cmpi slt, %102, %105 : vector<8x128xi32>
    %107 = arith.andi %104, %106 : vector<8x128xi1>
    %cst_63 = arith.constant -1.000000e+30 : f32
    %108 = vector.broadcast %cst_63 : f32 to vector<8x128xf32>
    %109 = arith.select %107, %100, %108 : vector<8x128xi1>, vector<8x128xf32>
    %cst_64 = arith.constant dense<0xFF800000> : vector<8xf32>
    %110 = vector.multi_reduction <maximumf>, %109, %cst_64 [1] : vector<8x128xf32> to vector<8xf32>
    %111 = vector.shape_cast %110 : vector<8xf32> to vector<8x1xf32>
    %cst_65 = arith.constant dense<0xFF800000> : vector<1xf32>
    %112 = vector.multi_reduction <maximumf>, %111, %cst_65 [0] : vector<8x1xf32> to vector<1xf32>
    %113 = vector.shape_cast %112 : vector<1xf32> to vector<1x1xf32>
    %114 = vector.broadcast %113 : vector<1x1xf32> to vector<8x128xf32>
    %115 = arith.subf %109, %114 : vector<8x128xf32>
    %116 = math.exp %115 : vector<8x128xf32>
    %cst_66 = arith.constant 0.000000e+00 : f32
    %117 = vector.broadcast %cst_66 : f32 to vector<8x128xf32>
    %118 = arith.select %107, %116, %117 : vector<8x128xi1>, vector<8x128xf32>
    %cst_67 = arith.constant dense<0.000000e+00> : vector<8xf32>
    %119 = vector.multi_reduction <add>, %118, %cst_67 [1] : vector<8x128xf32> to vector<8xf32>
    %120 = vector.shape_cast %119 : vector<8xf32> to vector<8x1xf32>
    %cst_68 = arith.constant dense<0.000000e+00> : vector<1xf32>
    %121 = vector.multi_reduction <add>, %120, %cst_68 [0] : vector<8x1xf32> to vector<1xf32>
    %122 = vector.shape_cast %121 : vector<1xf32> to vector<1x1xf32>
    %cst_69 = arith.constant 1.000000e-30 : f32
    %123 = vector.broadcast %cst_69 : f32 to vector<1x1xf32>
    %124 = arith.maximumf %122, %123 : vector<1x1xf32>
    %125 = vector.broadcast %124 : vector<1x1xf32> to vector<8x128xf32>
    %126 = arith.divf %118, %125 : vector<8x128xf32>
    %127 = vector.extract_strided_slice %126 {offsets = [0, 0], sizes = [8, 4], strides = [1, 1]} : vector<8x128xf32> to vector<8x4xf32>
    %c0_70 = arith.constant 0 : index
    %c0_71 = arith.constant 0 : index
    %c0_72 = arith.constant 0 : index
    %128 = vector.load %arg8[%c0_70, %c0_71, %c0_72] : memref<1x8x4xf32, #tpu.memory_space<vmem>>, vector<1x8x4xf32>
    %129 = vector.shape_cast %128 : vector<1x8x4xf32> to vector<8x4xf32>
    %130 = vector.shape_cast %127 : vector<8x4xf32> to vector<1x8x4xf32>
    tpu.vector_store %arg8[%c0_70, %c0_71, %c0_72], %130 {strides = array<i32>} : memref<1x8x4xf32, #tpu.memory_space<vmem>>, vector<1x8x4xf32>,
    return
  }
  func.func @transform_0(%arg0: i32, %arg1: memref<2xi32, #tpu.memory_space<smem>>) -> (i32, i32, i32) {
    %c0_i32 = arith.constant 0 : i32
    %c0_i32_0 = arith.constant 0 : i32
    %c0_i32_1 = arith.constant 0 : i32
    return %arg0, %c0_i32, %c0_i32_0 : i32, i32, i32
  }
  func.func @transform_1(%arg0: i32, %arg1: memref<2xi32, #tpu.memory_space<smem>>) -> (i32, i32) {
    %c0_i32 = arith.constant 0 : i32
    %c0_i32_0 = arith.constant 0 : i32
    %c0_i32_1 = arith.constant 0 : i32
    return %c0_i32, %c0_i32_0 : i32, i32
  }
  func.func @transform_2(%arg0: i32, %arg1: memref<2xi32, #tpu.memory_space<smem>>) -> (i32, i32) {
    %c0_i32 = arith.constant 0 : i32
    %c0_i32_0 = arith.constant 0 : i32
    %c0_i32_1 = arith.constant 0 : i32
    return %c0_i32, %c0_i32_0 : i32, i32
  }
  func.func @transform_3(%arg0: i32, %arg1: memref<2xi32, #tpu.memory_space<smem>>) -> (i32, i32, i32) {
    %c0_i32 = arith.constant 0 : i32
    %c0_i32_0 = arith.constant 0 : i32
    %c0_i32_1 = arith.constant 0 : i32
    %c0_i32_2 = arith.constant 0 : i32
    return %c0_i32, %c0_i32_0, %c0_i32_1 : i32, i32, i32
  }
  func.func @transform_4(%arg0: i32, %arg1: memref<2xi32, #tpu.memory_space<smem>>) -> (i32, i32) {
    %c0_i32 = arith.constant 0 : i32
    %c0_i32_0 = arith.constant 0 : i32
    %c0_i32_1 = arith.constant 0 : i32
    return %c0_i32, %c0_i32_0 : i32, i32
  }
  func.func @transform_5(%arg0: i32, %arg1: memref<2xi32, #tpu.memory_space<smem>>) -> (i32, i32, i32) {
    %c0_i32 = arith.constant 0 : i32
    %c0_i32_0 = arith.constant 0 : i32
    %c0_i32_1 = arith.constant 0 : i32
    %c0_i32_2 = arith.constant 0 : i32
    return %c0_i32, %c0_i32_0, %c0_i32_1 : i32, i32, i32
  }
  func.func @transform_6(%arg0: i32, %arg1: memref<2xi32, #tpu.memory_space<smem>>) -> (i32, i32, i32) {
    %c0_i32 = arith.constant 0 : i32
    %c0_i32_0 = arith.constant 0 : i32
    %c0_i32_1 = arith.constant 0 : i32
    return %arg0, %c0_i32, %c0_i32_0 : i32, i32, i32
  }
}

</mosaic_0001>

<llo_original>
// kernel: tpu_custom_call.1
$region0: #{tpu_custom_call.1}
  #allocation0 [shape = 'u32[]', space=smem, size = 0x4, offset = 0x4, fixed_abs, tag = 'smem constant byte address 0x4 - core index']
  #allocation1 [shape = 'u32[144,128]{1,0:T(1,128)}', space=vmem, size = 0x12000, scoped, tag = 'internal scratch']
  #allocation2 [shape = 's32[1]{0}', space=sflag, size = 0x4, scoped, tag = 'scoped memory for tpu_custom_call.1']
  #allocation3 [shape = 'u8[512]{0}', space=smem, size = 0x200, scoped, tag = 'prefetched SMEM operand 0']
  %s0 = inlined_call_operand.hbm [shape: s32[2], index: 0, kind: input, shape index: {}]
  %s1 = inlined_call_operand.hbm [shape: bf16[2,8,128], index: 1, kind: input, shape index: {}]
  %s2 = inlined_call_operand.hbm [shape: bf16[128,256], index: 2, kind: input, shape index: {}]
  %s3 = inlined_call_operand.hbm [shape: bf16[256,128], index: 3, kind: input, shape index: {}]
  %s4 = inlined_call_operand.hbm [shape: bf16[6,128,128], index: 4, kind: input, shape index: {}]
  %s5 = inlined_call_operand.vmem [shape: f32[1,256], index: 5, kind: input, shape index: {}]
  %s6 = inlined_call_operand.vmem [shape: f32[7,1,128], index: 6, kind: input, shape index: {}]
  %s7 = inlined_call_operand.vmem [shape: f32[2,8,4], index: 7, kind: output, shape index: {}]
  %s8 = sld [smem:[#allocation0]]
  $region73: #{tpu_custom_call.1} parent=0
    _
  %s10 = ssub.s32 1, %s8
  %s11 = scalar_select 0, %s10, %s8
  %13 = dma.hbm_to_smem %s0, 16, [#allocation3], [#allocation2]
  %14 = dma.done [#allocation2], 16
  %15 = sfence
  $region1: #{tpu_custom_call.1} parent=0
    #allocation4 [shape = 'u8[4096]{0}', space=vmem, size = 0x1000, scoped, tag = 'input window, operand 1']
    #allocation5 [shape = 's32[2]{0}', space=sflag, size = 0x8, scoped, tag = 'scoped memory for tpu_custom_call.1']
    #allocation6 [shape = 'u8[65536]{0}', space=vmem, size = 0x10000, scoped, tag = 'input window, operand 2, single buffered']
    #allocation7 [shape = 's32[1]{0}', space=sflag, size = 0x4, scoped, tag = 'scoped memory for tpu_custom_call.1']
    #allocation8 [shape = 'u8[65536]{0}', space=vmem, size = 0x10000, scoped, tag = 'input window, operand 3, single buffered']
    #allocation9 [shape = 'u8[196608]{0}', space=vmem, size = 0x30000, scoped, tag = 'input window, operand 4, single buffered']
    #allocation10 [shape = 's32[1]{0}', space=sflag, size = 0x4, scoped, tag = 'scoped memory for tpu_custom_call.1']
    %16 = vsyncpa [#allocation5], 0
    %s17 = scalar_lea.sflag [#allocation5], 1
    %18 = vsyncpa %s17, 0
    %19 = vsyncpa [#allocation7], 0
    %20 = vsyncpa [#allocation10], 0
    loop: start=0, step=1, limit=4
    $region2: #{tpu_custom_call.1} parent=1 // loop_pre_header
      _
    $region3: #{tpu_custom_call.1} parent=1 // loop_header
      %s22 = sphi 0, %s26
      %p23 = scmp.ge.s32.totalorder %s22, 4
      %s32 = sphi 0, %s34
      %s35 = sphi 0, %s32
      %s36 = sphi 0, %s35
      %s52 = sphi 0, %s36
      %s56 = sphi 0, %s56
      %s58 = sphi 0, %s56
      %s59 = sphi 0, %s58
      %s73 = sphi 0, %s59
      %s77 = sphi 0, %s77
      %s79 = sphi 0, %s77
      %s80 = sphi 0, %s79
      %s94 = sphi 0, %s80
      %s98 = sphi 0, %s98
      %s100 = sphi 0, %s98
      %s101 = sphi 0, %s100
      %s115 = sphi 0, %s101
      %s119 = sphi 0, %s119
      %s121 = sphi 0, %s119
      %s122 = sphi 0, %s121
      %s136 = sphi 0, %s122
      %s140 = sphi 0, %s140
      %s142 = sphi 0, %s140
      %s143 = sphi 0, %s142
      %s157 = sphi 0, %s143
      %s163 = sphi 0, %s165
      %s166 = sphi 0, %s163
      %s167 = sphi 0, %s166
      %s183 = sphi 0, %s167
    $region4: #{tpu_custom_call.1} parent=1 // loop_header_branch
      %25 = sbr.rel (%p23) target = $region8
    $region5: #{tpu_custom_call.1} parent=1 // loop_body
      %s27 = ssub.s32 %s22, 1
      %s28 = ssub.s32 %s22, 2
      %s29 = sadd.s32 %s22, 1
      %s30 = ssub.s32 %s22, %s29
      %p31 = scmp.eq.s32.totalorder %s30, 0
      %s33 = sadd.s32 %s32, 1
      %s34 = scalar_select %p31, %s32, %s33
      %p37 = pneg %p31
      %p38 = scmp.eq.s32.totalorder %s22, 1
      %p39 = por %p37, %p38
      %p40 = scmp.ne.s32.totalorder %s32, %s35
      %p41 = scmp.eq.s32.totalorder %s22, 0
      %p42 = por %p40, %p41
      %p43 = scmp.ne.s32.totalorder %s32, %s35
      %p44 = scmp.eq.s32.totalorder %s27, 1
      %p45 = por %p43, %p44
      %p46 = scmp.ne.s32.totalorder %s35, %s36
      %p47 = scmp.eq.s32.totalorder %s27, 0
      %p48 = por %p46, %p47
      %p49 = scmp.ne.s32.totalorder %s35, %s36
      %p50 = scmp.eq.s32.totalorder %s28, 1
      %p51 = por %p49, %p50
      %p53 = scmp.ne.s32.totalorder %s36, %s52
      %p54 = scmp.eq.s32.totalorder %s28, 0
      %p55 = por %p53, %p54
      %s57 = sadd.s32 %s56, 1
      %p60 = scmp.eq.s32.totalorder %s22, 1
      %p61 = scmp.ne.s32.totalorder %s56, %s58
      %p62 = scmp.eq.s32.totalorder %s22, 0
      %p63 = por %p61, %p62
      %p64 = scmp.ne.s32.totalorder %s56, %s58
      %p65 = scmp.eq.s32.totalorder %s27, 1
      %p66 = por %p64, %p65
      %p67 = scmp.ne.s32.totalorder %s58, %s59
      %p68 = scmp.eq.s32.totalorder %s27, 0
      %p69 = por %p67, %p68
      %p70 = scmp.ne.s32.totalorder %s58, %s59
      %p71 = scmp.eq.s32.totalorder %s28, 1
      %p72 = por %p70, %p71
      %p74 = scmp.ne.s32.totalorder %s59, %s73
      %p75 = scmp.eq.s32.totalorder %s28, 0
      %p76 = por %p74, %p75
      %s78 = sadd.s32 %s77, 1
      %p81 = scmp.eq.s32.totalorder %s22, 1
      %p82 = scmp.ne.s32.totalorder %s77, %s79
      %p83 = scmp.eq.s32.totalorder %s22, 0
      %p84 = por %p82, %p83
      %p85 = scmp.ne.s32.totalorder %s77, %s79
      %p86 = scmp.eq.s32.totalorder %s27, 1
      %p87 = por %p85, %p86
      %p88 = scmp.ne.s32.totalorder %s79, %s80
      %p89 = scmp.eq.s32.totalorder %s27, 0
      %p90 = por %p88, %p89
      %p91 = scmp.ne.s32.totalorder %s79, %s80
      %p92 = scmp.eq.s32.totalorder %s28, 1
      %p93 = por %p91, %p92
      %p95 = scmp.ne.s32.totalorder %s80, %s94
      %p96 = scmp.eq.s32.totalorder %s28, 0
      %p97 = por %p95, %p96
      %s99 = sadd.s32 %s98, 1
      %p102 = scmp.eq.s32.totalorder %s22, 1
      %p103 = scmp.ne.s32.totalorder %s98, %s100
      %p104 = scmp.eq.s32.totalorder %s22, 0
      %p105 = por %p103, %p104
      %p106 = scmp.ne.s32.totalorder %s98, %s100
      %p107 = scmp.eq.s32.totalorder %s27, 1
      %p108 = por %p106, %p107
      %p109 = scmp.ne.s32.totalorder %s100, %s101
      %p110 = scmp.eq.s32.totalorder %s27, 0
      %p111 = por %p109, %p110
      %p112 = scmp.ne.s32.totalorder %s100, %s101
      %p113 = scmp.eq.s32.totalorder %s28, 1
      %p114 = por %p112, %p113
      %p116 = scmp.ne.s32.totalorder %s101, %s115
      %p117 = scmp.eq.s32.totalorder %s28, 0
      %p118 = por %p116, %p117
      %s120 = sadd.s32 %s119, 1
      %p123 = scmp.eq.s32.totalorder %s22, 1
      %p124 = scmp.ne.s32.totalorder %s119, %s121
      %p125 = scmp.eq.s32.totalorder %s22, 0
      %p126 = por %p124, %p125
      %p127 = scmp.ne.s32.totalorder %s119, %s121
      %p128 = scmp.eq.s32.totalorder %s27, 1
      %p129 = por %p127, %p128
      %p130 = scmp.ne.s32.totalorder %s121, %s122
      %p131 = scmp.eq.s32.totalorder %s27, 0
      %p132 = por %p130, %p131
      %p133 = scmp.ne.s32.totalorder %s121, %s122
      %p134 = scmp.eq.s32.totalorder %s28, 1
      %p135 = por %p133, %p134
      %p137 = scmp.ne.s32.totalorder %s122, %s136
      %p138 = scmp.eq.s32.totalorder %s28, 0
      %p139 = por %p137, %p138
      %s141 = sadd.s32 %s140, 1
      %p144 = scmp.eq.s32.totalorder %s22, 1
      %p145 = scmp.ne.s32.totalorder %s140, %s142
      %p146 = scmp.eq.s32.totalorder %s22, 0
      %p147 = por %p145, %p146
      %p148 = scmp.ne.s32.totalorder %s140, %s142
      %p149 = scmp.eq.s32.totalorder %s27, 1
      %p150 = por %p148, %p149
      %p151 = scmp.ne.s32.totalorder %s142, %s143
      %p152 = scmp.eq.s32.totalorder %s27, 0
      %p153 = por %p151, %p152
      %p154 = scmp.ne.s32.totalorder %s142, %s143
      %p155 = scmp.eq.s32.totalorder %s28, 1
      %p156 = por %p154, %p155
      %p158 = scmp.ne.s32.totalorder %s143, %s157
      %p159 = scmp.eq.s32.totalorder %s28, 0
      %p160 = por %p158, %p159
      %s161 = ssub.s32 %s22, %s29
      %p162 = scmp.eq.s32.totalorder %s161, 0
      %s164 = sadd.s32 %s163, 1
      %s165 = scalar_select %p162, %s163, %s164
      %p168 = pneg %p162
      %p169 = scmp.eq.s32.totalorder %s22, 1
      %p170 = por %p168, %p169
      %p171 = scmp.ne.s32.totalorder %s163, %s166
      %p172 = scmp.eq.s32.totalorder %s22, 0
      %p173 = por %p171, %p172
      %p174 = scmp.ne.s32.totalorder %s163, %s166
      %p175 = scmp.eq.s32.totalorder %s27, 1
      %p176 = por %p174, %p175
      %p177 = scmp.ne.s32.totalorder %s166, %s167
      %p178 = scmp.eq.s32.totalorder %s27, 0
      %p179 = por %p177, %p178
      %p180 = scmp.ne.s32.totalorder %s166, %s167
      %p181 = scmp.eq.s32.totalorder %s28, 1
      %p182 = por %p180, %p181
      %p184 = scmp.ne.s32.totalorder %s167, %s183
      %p185 = scmp.eq.s32.totalorder %s28, 0
      %p186 = por %p184, %p185
      %p187 = scmp.le.s32.totalorder 1, %s22
      %p188 = scmp.lt.s32.totalorder %s22, 3
      %p189 = pnand %p187, %p188
      %p190 = pneg %p189
      // Predicated region
      $region9: #{tpu_custom_call.1} parent=5 // pred_check
        _
      $region10: #{tpu_custom_call.1} parent=5 // pred_check_branch
        %192 = sbr.rel (%p189) target = $region12
      $region11: #{tpu_custom_call.1} parent=5 // pred_region
        %s193 = ssub.s32 %s22, 1
        // Predicated region
        $region13: #{tpu_custom_call.1} parent=11 // pred_check
          %p194 = pneg %p69
        $region14: #{tpu_custom_call.1} parent=11 // pred_check_branch
          %196 = sbr.rel (%p194) target = $region16
        $region15: #{tpu_custom_call.1} parent=11 // pred_region
          %s198 = ssub.s32 2048, 2048
          %199 = vsyncadd [#allocation7], %s198
          %s200 = sshll.u32 [#allocation6], 4
          %s201 = int_to_ptr.vmem [resolvable:$true] %s200
          %206 = dma.hbm_to_vmem [thread:$0]  %s2, 2048, %s201, [#allocation7], 128, 128, 8
        $region16: #{tpu_custom_call.1} parent=11 // pred_fallthru
          _
        // Predicated region
        $region17: #{tpu_custom_call.1} parent=11 // pred_check
          %p207 = pneg %p90
        $region18: #{tpu_custom_call.1} parent=11 // pred_check_branch
          %209 = sbr.rel (%p207) target = $region20
        $region19: #{tpu_custom_call.1} parent=11 // pred_region
          %s211 = ssub.s32 2048, 2048
          %212 = vsyncadd [#allocation7], %s211
          %s213 = sshll.u32 [#allocation8], 4
          %s214 = int_to_ptr.vmem [resolvable:$true] %s213
          %219 = dma.hbm_to_vmem [thread:$0]  %s3, 2048, %s214, [#allocation7], 64, 64, 4
        $region20: #{tpu_custom_call.1} parent=11 // pred_fallthru
          _
        // Predicated region
        $region21: #{tpu_custom_call.1} parent=11 // pred_check
          %p220 = pneg %p111
        $region22: #{tpu_custom_call.1} parent=11 // pred_check_branch
          %222 = sbr.rel (%p220) target = $region24
        $region23: #{tpu_custom_call.1} parent=11 // pred_region
          %s224 = ssub.s32 6144, 6144
          %225 = vsyncadd [#allocation10], %s224
          %s226 = sshll.u32 [#allocation9], 4
          %s227 = int_to_ptr.vmem [resolvable:$true] %s226
          %232 = dma.hbm_to_vmem [thread:$0]  %s4, 6144, %s227, [#allocation10], 64, 64, 4
        $region24: #{tpu_custom_call.1} parent=11 // pred_fallthru
          _
        // Predicated region
        $region25: #{tpu_custom_call.1} parent=11 // pred_check
          %p233 = pneg %p132
        $region26: #{tpu_custom_call.1} parent=11 // pred_check_branch
          %235 = sbr.rel (%p233) target = $region28
        $region27: #{tpu_custom_call.1} parent=11 // pred_region
          _
        $region28: #{tpu_custom_call.1} parent=11 // pred_fallthru
          _
        // Predicated region
        $region29: #{tpu_custom_call.1} parent=11 // pred_check
          %p236 = pneg %p153
        $region30: #{tpu_custom_call.1} parent=11 // pred_check_branch
          %238 = sbr.rel (%p236) target = $region32
        $region31: #{tpu_custom_call.1} parent=11 // pred_region
          _
        $region32: #{tpu_custom_call.1} parent=11 // pred_fallthru
          _
      $region12: #{tpu_custom_call.1} parent=5 // pred_fallthru
        _
      %p239 = scmp.lt.s32.totalorder %s22, 2
      // Predicated region
      $region33: #{tpu_custom_call.1} parent=5 // pred_check
        %p240 = pneg %p239
      $region34: #{tpu_custom_call.1} parent=5 // pred_check_branch
        %242 = sbr.rel (%p240) target = $region36
      $region35: #{tpu_custom_call.1} parent=5 // pred_region
        // Predicated region
        $region37: #{tpu_custom_call.1} parent=35 // pred_check
          %p243 = pneg %p42
        $region38: #{tpu_custom_call.1} parent=35 // pred_check_branch
          %245 = sbr.rel (%p243) target = $region40
        $region39: #{tpu_custom_call.1} parent=35 // pred_region
          %s246 = sand.u32 %s32, 1
          %s247 = scalar_lea.sflag [#allocation5], %s246
          %s248 = sand.u32 %s32, 1
          %s249 = smul.addr %s248, 4
          %s250 = scalar_lea.vmem [#allocation4], %s249
          %s252 = ssub.s32 64, 64
          %253 = vsyncadd %s247, %s252
          %s254 = smul.addr %s22, 64
          %s255 = scalar_lea.hbm %s1, %s254
          %s257 = sshll.u32 %s250, 4
          %s258 = int_to_ptr.vmem [resolvable:$true] %s257
          %260 = dma.hbm_to_vmem [thread:$0]  %s255, 64, %s258, %s247
        $region40: #{tpu_custom_call.1} parent=35 // pred_fallthru
          _
      $region36: #{tpu_custom_call.1} parent=5 // pred_fallthru
        _
      %p261 = scmp.le.s32.totalorder 1, %s22
      %p262 = scmp.lt.s32.totalorder %s22, 3
      %p263 = pnand %p261, %p262
      %p264 = pneg %p263
      // Predicated region
      $region41: #{tpu_custom_call.1} parent=5 // pred_check
        _
      $region42: #{tpu_custom_call.1} parent=5 // pred_check_branch
        %266 = sbr.rel (%p263) target = $region44
      $region43: #{tpu_custom_call.1} parent=5 // pred_region
        %s267 = ssub.s32 %s22, 1
        %s268 = sand.u32 %s35, 1
        %s269 = scalar_lea.sflag [#allocation5], %s268
        %s270 = sand.u32 %s35, 1
        %s271 = smul.addr %s270, 4
        %s272 = scalar_lea.vmem [#allocation4], %s271
        // Predicated region
        $region45: #{tpu_custom_call.1} parent=43 // pred_check
          %p273 = pneg %p48
        $region46: #{tpu_custom_call.1} parent=43 // pred_check_branch
          %275 = sbr.rel (%p273) target = $region48
        $region47: #{tpu_custom_call.1} parent=43 // pred_region
          %276 = dma.done %s269, 64
        $region48: #{tpu_custom_call.1} parent=43 // pred_fallthru
          _
        // Predicated region
        $region49: #{tpu_custom_call.1} parent=43 // pred_check
          %p277 = pneg %p69
        $region50: #{tpu_custom_call.1} parent=43 // pred_check_branch
          %279 = sbr.rel (%p277) target = $region52
        $region51: #{tpu_custom_call.1} parent=43 // pred_region
          %280 = dma.done [#allocation7], 2048
        $region52: #{tpu_custom_call.1} parent=43 // pred_fallthru
          _
        // Predicated region
        $region53: #{tpu_custom_call.1} parent=43 // pred_check
          %p281 = pneg %p90
        $region54: #{tpu_custom_call.1} parent=43 // pred_check_branch
          %283 = sbr.rel (%p281) target = $region56
        $region55: #{tpu_custom_call.1} parent=43 // pred_region
          %284 = dma.done [#allocation7], 2048
        $region56: #{tpu_custom_call.1} parent=43 // pred_fallthru
          _
        // Predicated region
        $region57: #{tpu_custom_call.1} parent=43 // pred_check
          %p285 = pneg %p111
        $region58: #{tpu_custom_call.1} parent=43 // pred_check_branch
          %287 = sbr.rel (%p285) target = $region60
        $region59: #{tpu_custom_call.1} parent=43 // pred_region
          %288 = dma.done [#allocation10], 6144
        $region60: #{tpu_custom_call.1} parent=43 // pred_fallthru
          _
        %s289 = sand.u32 %s35, 1
        %s290 = scalar_lea.sflag [#allocation5], %s289
        %s291 = sand.u32 %s35, 1
        %s292 = smul.addr %s291, 4
        %s293 = scalar_lea.vmem [#allocation4], %s292
        %p294 = pneg %p48
        %p295 = pneg %p45
        %p296 = pneg %p69
        %p297 = pneg %p66
        %p298 = pneg %p90
        %p299 = pneg %p87
        %p300 = pneg %p111
        %p301 = pneg %p108
        %p302 = pneg %p132
        %p303 = pneg %p129
        %p304 = pneg %p153
        %p305 = pneg %p150
        %p306 = pneg %p179
        %p307 = pneg %p176
        %p308 = scmp.lt.s32.totalorder %s27, 1
        %s309 = scalar_select %p308, %s27, 1
        %s310 = smul.addr %s309, 8
        %s311 = scalar_lea.vmem %s7, %s310
        %p312 = scmp.lt.s32.totalorder %s27, 1
        %s313 = scalar_select %p312, %s27, 1
        %s314 = smul.addr %s313, 8
        %s315 = scalar_lea.vmem %s7, %s314
        %s317 = sld [smem:[#allocation3 + %s27]]
        %v318 = vld [vmem:[%s272] sm:$0xf]
        %v319 = vld [vmem:[#allocation6] sm:$0xff]
        %v320 = vld [vmem:[#allocation6 + $0x8] sm:$0xff]
        %v321 = vld [vmem:[#allocation6 + $0x10] sm:$0xff]
        %v322 = vld [vmem:[#allocation6 + $0x18] sm:$0xff]
        %v323 = vld [vmem:[#allocation6 + $0x20] sm:$0xff]
        %v324 = vld [vmem:[#allocation6 + $0x28] sm:$0xff]
        %v325 = vld [vmem:[#allocation6 + $0x30] sm:$0xff]
        %v326 = vld [vmem:[#allocation6 + $0x38] sm:$0xff]
        %v327 = vld [vmem:[#allocation6 + $0x40] sm:$0xff]
        %v328 = vld [vmem:[#allocation6 + $0x48] sm:$0xff]
        %v329 = vld [vmem:[#allocation6 + $0x50] sm:$0xff]
        %v330 = vld [vmem:[#allocation6 + $0x58] sm:$0xff]
        %v331 = vld [vmem:[#allocation6 + $0x60] sm:$0xff]
        %v332 = vld [vmem:[#allocation6 + $0x68] sm:$0xff]
        %v333 = vld [vmem:[#allocation6 + $0x70] sm:$0xff]
        %v334 = vld [vmem:[#allocation6 + $0x78] sm:$0xff]
        %v335 = vld [vmem:[%s5] sm:$0x3]
        %v337 = vlaneseq
        %v338 = vshrl.u32 %v337, 7
        %v339 = vsub.s32 0, %v338
        %v340 = vrot.slane %v335, %v339
        %v341 = vlaneseq
        %v342 = vshrl.u32 %v341, 7
        %v343 = vsub.s32 1, %v342
        %v344 = vrot.slane %v335, %v343
        %v363 = vunpack.c.l.b16 %v319
        %v364 = vunpack.c.h.b16 %v319
        %v365 = vunpack.c.l.b16 %v320
        %v366 = vunpack.c.h.b16 %v320
        %v367 = vunpack.c.l.b16 %v321
        %v368 = vunpack.c.h.b16 %v321
        %v369 = vunpack.c.l.b16 %v322
        %v370 = vunpack.c.h.b16 %v322
        %v371 = vunpack.c.l.b16 %v323
        %v372 = vunpack.c.h.b16 %v323
        %v373 = vunpack.c.l.b16 %v324
        %v374 = vunpack.c.h.b16 %v324
        %v375 = vunpack.c.l.b16 %v325
        %v376 = vunpack.c.h.b16 %v325
        %v377 = vunpack.c.l.b16 %v326
        %v378 = vunpack.c.h.b16 %v326
        %v379 = vunpack.c.l.b16 %v327
        %v380 = vunpack.c.h.b16 %v327
        %v381 = vunpack.c.l.b16 %v328
        %v382 = vunpack.c.h.b16 %v328
        %v383 = vunpack.c.l.b16 %v329
        %v384 = vunpack.c.h.b16 %v329
        %v385 = vunpack.c.l.b16 %v330
        %v386 = vunpack.c.h.b16 %v330
        %v387 = vunpack.c.l.b16 %v331
        %v388 = vunpack.c.h.b16 %v331
        %v389 = vunpack.c.l.b16 %v332
        %v390 = vunpack.c.h.b16 %v332
        %v391 = vunpack.c.l.b16 %v333
        %v392 = vunpack.c.h.b16 %v333
        %v393 = vunpack.c.l.b16 %v334
        %v394 = vunpack.c.h.b16 %v334
        %v395 = vpack.c.b16 %v365, %v363
        %v396 = vpack.c.b16 %v366, %v364
        %v397 = vpack.c.b16 %v369, %v367
        %v398 = vpack.c.b16 %v370, %v368
        %v399 = vpack.c.b16 %v373, %v371
        %v400 = vpack.c.b16 %v374, %v372
        %v401 = vpack.c.b16 %v377, %v375
        %v402 = vpack.c.b16 %v378, %v376
        %v403 = vpack.c.b16 %v381, %v379
        %v404 = vpack.c.b16 %v382, %v380
        %v405 = vpack.c.b16 %v385, %v383
        %v406 = vpack.c.b16 %v386, %v384
        %v407 = vpack.c.b16 %v389, %v387
        %v408 = vpack.c.b16 %v390, %v388
        %v409 = vpack.c.b16 %v393, %v391
        %v410 = vpack.c.b16 %v394, %v392
        %427 = vmatprep.subr.bf16.mxu0 %v410
        %428 = vmatpush1.bf16.msra.mxu0 %v409
        %429 = vmatprep.subr.bf16.mxu0 %v408
        %430 = vmatpush1.bf16.msra.mxu0 %v407
        %431 = vmatprep.subr.bf16.mxu0 %v406
        %432 = vmatpush1.bf16.msra.mxu0 %v405
        %433 = vmatprep.subr.bf16.mxu0 %v404
        %434 = vmatpush1.bf16.msra.mxu0 %v403
        %435 = vmatprep.subr.bf16.mxu0 %v402
        %436 = vmatpush1.bf16.msra.mxu0 %v401
        %437 = vmatprep.subr.bf16.mxu0 %v400
        %438 = vmatpush1.bf16.msra.mxu0 %v399
        %439 = vmatprep.subr.bf16.mxu0 %v398
        %440 = vmatpush1.bf16.msra.mxu0 %v397
        %441 = vmatprep.subr.bf16.mxu0 %v396
        %442 = vmatpush1.bf16.msra.mxu0 %v395
        %443 = vmatprep.subr.bf16.mxu0 0
        %444 = vmatpush2.bf16.msra.mxu0 0
        %445 = vmatprep.subr.bf16.mxu0 0
        %446 = vmatpush2.bf16.msra.mxu0 0
        %447 = vmatprep.subr.bf16.mxu0 0
        %448 = vmatpush2.bf16.msra.mxu0 0
        %449 = vmatprep.subr.bf16.mxu0 0
        %450 = vmatpush2.bf16.msra.mxu0 0
        %451 = vmatprep.subr.bf16.mxu0 0
        %452 = vmatpush2.bf16.msra.mxu0 0
        %453 = vmatprep.subr.bf16.mxu0 0
        %454 = vmatpush2.bf16.msra.mxu0 0
        %455 = vmatprep.subr.bf16.mxu0 0
        %456 = vmatpush2.bf16.msra.mxu0 0
        %457 = vmatprep.subr.bf16.mxu0 0
        %458 = vmatpush2.bf16.msra.mxu0 0
        %459 = vmatprep.mubr.bf16.mxu0 0
        %460 = vmatmul.mubr.bf16.gmra.mxu0 %v318
        %v461 = vpop.f32.mrf.mxu0
        %v462 = vadd.f32 %v340, %v461
        %v463 = vpop.f32.mrf.mxu0
        %v464 = vadd.f32 %v344, %v463
        %v465 = vpop.f32.mrf.mxu0
        %v466 = vpop.f32.mrf.mxu0
        %467 = vdwg.mxu0
        %vm468 = vcmp.gt.f32.partialorder %v462, 0.0
        %vm469 = vcmp.gt.f32.partialorder %v464, 0.0
        %v470 = vmul.f32 %v462, 0.01
        %v471 = vmul.f32 %v464, 0.01
        %v472 = vsel %vm468, %v462, %v470
        %v473 = vsel %vm469, %v464, %v471
        %v474 = vpack.c.bf16 %v472, %v472
        %v475 = vpack.c.bf16 %v473, %v473
        %v476 = vld [vmem:[#allocation8] sm:$0xf]
        %v477 = vld [vmem:[#allocation8 + $0x4] sm:$0xf]
        %v478 = vld [vmem:[#allocation8 + $0x8] sm:$0xf]
        %v479 = vld [vmem:[#allocation8 + $0xc] sm:$0xf]
        %v480 = vld [vmem:[#allocation8 + $0x10] sm:$0xf]
        %v481 = vld [vmem:[#allocation8 + $0x14] sm:$0xf]
        %v482 = vld [vmem:[#allocation8 + $0x18] sm:$0xf]
        %v483 = vld [vmem:[#allocation8 + $0x1c] sm:$0xf]
        %v484 = vld [vmem:[#allocation8 + $0x20] sm:$0xf]
        %v485 = vld [vmem:[#allocation8 + $0x24] sm:$0xf]
        %v486 = vld [vmem:[#allocation8 + $0x28] sm:$0xf]
        %v487 = vld [vmem:[#allocation8 + $0x2c] sm:$0xf]
        %v488 = vld [vmem:[#allocation8 + $0x30] sm:$0xf]
        %v489 = vld [vmem:[#allocation8 + $0x34] sm:$0xf]
        %v490 = vld [vmem:[#allocation8 + $0x38] sm:$0xf]
        %v491 = vld [vmem:[#allocation8 + $0x3c] sm:$0xf]
        %v492 = vld [vmem:[#allocation8 + $0x40] sm:$0xf]
        %v493 = vld [vmem:[#allocation8 + $0x44] sm:$0xf]
        %v494 = vld [vmem:[#allocation8 + $0x48] sm:$0xf]
        %v495 = vld [vmem:[#allocation8 + $0x4c] sm:$0xf]
        %v496 = vld [vmem:[#allocation8 + $0x50] sm:$0xf]
        %v497 = vld [vmem:[#allocation8 + $0x54] sm:$0xf]
        %v498 = vld [vmem:[#allocation8 + $0x58] sm:$0xf]
        %v499 = vld [vmem:[#allocation8 + $0x5c] sm:$0xf]
        %v500 = vld [vmem:[#allocation8 + $0x60] sm:$0xf]
        %v501 = vld [vmem:[#allocation8 + $0x64] sm:$0xf]
        %v502 = vld [vmem:[#allocation8 + $0x68] sm:$0xf]
        %v503 = vld [vmem:[#allocation8 + $0x6c] sm:$0xf]
        %v504 = vld [vmem:[#allocation8 + $0x70] sm:$0xf]
        %v505 = vld [vmem:[#allocation8 + $0x74] sm:$0xf]
        %v506 = vld [vmem:[#allocation8 + $0x78] sm:$0xf]
        %v507 = vld [vmem:[#allocation8 + $0x7c] sm:$0xf]
        %v508 = vld [vmem:[%s6] sm:$0x1]
        %v510 = vlaneseq
        %v511 = vshrl.u32 %v510, 7
        %v512 = vsub.s32 0, %v511
        %v513 = vrot.slane %v508, %v512
        %v547 = vunpack.c.l.b16 %v476
        %v548 = vunpack.c.l.b16 %v477
        %v549 = vunpack.c.l.b16 %v478
        %v550 = vunpack.c.l.b16 %v479
        %v551 = vunpack.c.l.b16 %v480
        %v552 = vunpack.c.l.b16 %v481
        %v553 = vunpack.c.l.b16 %v482
        %v554 = vunpack.c.l.b16 %v483
        %v555 = vunpack.c.l.b16 %v484
        %v556 = vunpack.c.l.b16 %v485
        %v557 = vunpack.c.l.b16 %v486
        %v558 = vunpack.c.l.b16 %v487
        %v559 = vunpack.c.l.b16 %v488
        %v560 = vunpack.c.l.b16 %v489
        %v561 = vunpack.c.l.b16 %v490
        %v562 = vunpack.c.l.b16 %v491
        %v563 = vunpack.c.l.b16 %v492
        %v564 = vunpack.c.l.b16 %v493
        %v565 = vunpack.c.l.b16 %v494
        %v566 = vunpack.c.l.b16 %v495
        %v567 = vunpack.c.l.b16 %v496
        %v568 = vunpack.c.l.b16 %v497
        %v569 = vunpack.c.l.b16 %v498
        %v570 = vunpack.c.l.b16 %v499
        %v571 = vunpack.c.l.b16 %v500
        %v572 = vunpack.c.l.b16 %v501
        %v573 = vunpack.c.l.b16 %v502
        %v574 = vunpack.c.l.b16 %v503
        %v575 = vunpack.c.l.b16 %v504
        %v576 = vunpack.c.l.b16 %v505
        %v577 = vunpack.c.l.b16 %v506
        %v578 = vunpack.c.l.b16 %v507
        %v579 = vpack.c.b16 %v548, %v547
        %v580 = vpack.c.b16 %v550, %v549
        %v581 = vpack.c.b16 %v552, %v551
        %v582 = vpack.c.b16 %v554, %v553
        %v583 = vpack.c.b16 %v556, %v555
        %v584 = vpack.c.b16 %v558, %v557
        %v585 = vpack.c.b16 %v560, %v559
        %v586 = vpack.c.b16 %v562, %v561
        %v587 = vpack.c.b16 %v564, %v563
        %v588 = vpack.c.b16 %v566, %v565
        %v589 = vpack.c.b16 %v568, %v567
        %v590 = vpack.c.b16 %v570, %v569
        %v591 = vpack.c.b16 %v572, %v571
        %v592 = vpack.c.b16 %v574, %v573
        %v593 = vpack.c.b16 %v576, %v575
        %v594 = vpack.c.b16 %v578, %v577
        %611 = vmatprep.subr.bf16.mxu0 0
        %612 = vmatpush1.bf16.msra.mxu0 %v586
        %613 = vmatprep.subr.bf16.mxu0 0
        %614 = vmatpush1.bf16.msra.mxu0 %v585
        %615 = vmatprep.subr.bf16.mxu0 0
        %616 = vmatpush1.bf16.msra.mxu0 %v584
        %617 = vmatprep.subr.bf16.mxu0 0
        %618 = vmatpush1.bf16.msra.mxu0 %v583
        %619 = vmatprep.subr.bf16.mxu0 0
        %620 = vmatpush1.bf16.msra.mxu0 %v582
        %621 = vmatprep.subr.bf16.mxu0 0
        %622 = vmatpush1.bf16.msra.mxu0 %v581
        %623 = vmatprep.subr.bf16.mxu0 0
        %624 = vmatpush1.bf16.msra.mxu0 %v580
        %625 = vmatprep.subr.bf16.mxu0 0
        %626 = vmatpush1.bf16.msra.mxu0 %v579
        %627 = vmatprep.subr.bf16.mxu0 0
        %628 = vmatpush2.bf16.msra.mxu0 %v594
        %629 = vmatprep.subr.bf16.mxu0 0
        %630 = vmatpush2.bf16.msra.mxu0 %v593
        %631 = vmatprep.subr.bf16.mxu0 0
        %632 = vmatpush2.bf16.msra.mxu0 %v592
        %633 = vmatprep.subr.bf16.mxu0 0
        %634 = vmatpush2.bf16.msra.mxu0 %v591
        %635 = vmatprep.subr.bf16.mxu0 0
        %636 = vmatpush2.bf16.msra.mxu0 %v590
        %637 = vmatprep.subr.bf16.mxu0 0
        %638 = vmatpush2.bf16.msra.mxu0 %v589
        %639 = vmatprep.subr.bf16.mxu0 0
        %640 = vmatpush2.bf16.msra.mxu0 %v588
        %641 = vmatprep.subr.bf16.mxu0 0
        %642 = vmatpush2.bf16.msra.mxu0 %v587
        %643 = vmatprep.mubr.bf16.mxu0 %v475
        %644 = vmatmul.mubr.bf16.gmra.mxu0 %v474
        %v645 = vpop.f32.mrf.mxu0
        %v646 = vadd.f32 %v513, %v645
        %v647 = vpop.f32.mrf.mxu0
        %v648 = vpop.f32.mrf.mxu0
        %v649 = vpop.f32.mrf.mxu0
        %650 = vdwg.mxu0
        %vm651 = vcmp.gt.f32.partialorder %v646, 0.0
        %v652 = vmul.f32 %v646, 0.01
        %v653 = vsel %vm651, %v646, %v652
        %v654 = vpack.c.bf16 %v653, %v653
        %v655 = vld [vmem:[#allocation9] sm:$0xf]
        %v656 = vld [vmem:[#allocation9 + $0x4] sm:$0xf]
        %v657 = vld [vmem:[#allocation9 + $0x8] sm:$0xf]
        %v658 = vld [vmem:[#allocation9 + $0xc] sm:$0xf]
        %v659 = vld [vmem:[#allocation9 + $0x10] sm:$0xf]
        %v660 = vld [vmem:[#allocation9 + $0x14] sm:$0xf]
        %v661 = vld [vmem:[#allocation9 + $0x18] sm:$0xf]
        %v662 = vld [vmem:[#allocation9 + $0x1c] sm:$0xf]
        %v663 = vld [vmem:[#allocation9 + $0x20] sm:$0xf]
        %v664 = vld [vmem:[#allocation9 + $0x24] sm:$0xf]
        %v665 = vld [vmem:[#allocation9 + $0x28] sm:$0xf]
        %v666 = vld [vmem:[#allocation9 + $0x2c] sm:$0xf]
        %v667 = vld [vmem:[#allocation9 + $0x30] sm:$0xf]
        %v668 = vld [vmem:[#allocation9 + $0x34] sm:$0xf]
        %v669 = vld [vmem:[#allocation9 + $0x38] sm:$0xf]
        %v670 = vld [vmem:[#allocation9 + $0x3c] sm:$0xf]
        %s671 = scalar_lea.vmem %s6, 1
        %v672 = vld [vmem:[%s671] sm:$0x1]
        %v674 = vlaneseq
        %v675 = vshrl.u32 %v674, 7
        %v676 = vsub.s32 0, %v675
        %v677 = vrot.slane %v672, %v676
        %v695 = vunpack.c.l.b16 %v655
        %v696 = vunpack.c.l.b16 %v656
        %v697 = vunpack.c.l.b16 %v657
        %v698 = vunpack.c.l.b16 %v658
        %v699 = vunpack.c.l.b16 %v659
        %v700 = vunpack.c.l.b16 %v660
        %v701 = vunpack.c.l.b16 %v661
        %v702 = vunpack.c.l.b16 %v662
        %v703 = vunpack.c.l.b16 %v663
        %v704 = vunpack.c.l.b16 %v664
        %v705 = vunpack.c.l.b16 %v665
        %v706 = vunpack.c.l.b16 %v666
        %v707 = vunpack.c.l.b16 %v667
        %v708 = vunpack.c.l.b16 %v668
        %v709 = vunpack.c.l.b16 %v669
        %v710 = vunpack.c.l.b16 %v670
        %v711 = vpack.c.b16 %v696, %v695
        %v712 = vpack.c.b16 %v698, %v697
        %v713 = vpack.c.b16 %v700, %v699
        %v714 = vpack.c.b16 %v702, %v701
        %v715 = vpack.c.b16 %v704, %v703
        %v716 = vpack.c.b16 %v706, %v705
        %v717 = vpack.c.b16 %v708, %v707
        %v718 = vpack.c.b16 %v710, %v709
        %727 = vmatprep.subr.bf16.mxu0 0
        %728 = vmatpush1.bf16.msra.mxu0 %v718
        %729 = vmatprep.subr.bf16.mxu0 0
        %730 = vmatpush1.bf16.msra.mxu0 %v717
        %731 = vmatprep.subr.bf16.mxu0 0
        %732 = vmatpush1.bf16.msra.mxu0 %v716
        %733 = vmatprep.subr.bf16.mxu0 0
        %734 = vmatpush1.bf16.msra.mxu0 %v715
        %735 = vmatprep.subr.bf16.mxu0 0
        %736 = vmatpush1.bf16.msra.mxu0 %v714
        %737 = vmatprep.subr.bf16.mxu0 0
        %738 = vmatpush1.bf16.msra.mxu0 %v713
        %739 = vmatprep.subr.bf16.mxu0 0
        %740 = vmatpush1.bf16.msra.mxu0 %v712
        %741 = vmatprep.subr.bf16.mxu0 0
        %742 = vmatpush1.bf16.msra.mxu0 %v711
        %743 = vmatprep.subr.bf16.mxu0 0
        %744 = vmatpush2.bf16.msra.mxu0 0
        %745 = vmatprep.subr.bf16.mxu0 0
        %746 = vmatpush2.bf16.msra.mxu0 0
        %747 = vmatprep.subr.bf16.mxu0 0
        %748 = vmatpush2.bf16.msra.mxu0 0
        %749 = vmatprep.subr.bf16.mxu0 0
        %750 = vmatpush2.bf16.msra.mxu0 0
        %751 = vmatprep.subr.bf16.mxu0 0
        %752 = vmatpush2.bf16.msra.mxu0 0
        %753 = vmatprep.subr.bf16.mxu0 0
        %754 = vmatpush2.bf16.msra.mxu0 0
        %755 = vmatprep.subr.bf16.mxu0 0
        %756 = vmatpush2.bf16.msra.mxu0 0
        %757 = vmatprep.subr.bf16.mxu0 0
        %758 = vmatpush2.bf16.msra.mxu0 0
        %759 = vmatprep.mubr.bf16.mxu0 0
        %760 = vmatmul.mubr.bf16.gmra.mxu0 %v654
        %v761 = vpop.f32.mrf.mxu0
        %v762 = vadd.f32 %v677, %v761
        %v763 = vpop.f32.mrf.mxu0
        %v764 = vpop.f32.mrf.mxu0
        %v765 = vpop.f32.mrf.mxu0
        %766 = vdwg.mxu0
        %vm767 = vcmp.gt.f32.partialorder %v762, 0.0
        %v768 = vmul.f32 %v762, 0.01
        %v769 = vsel %vm767, %v762, %v768
        %v770 = vpack.c.bf16 %v769, %v769
        %s771 = scalar_lea.vmem [#allocation9], 64
        %v772 = vld [vmem:[%s771] sm:$0xf]
        %v773 = vld [vmem:[%s771 + $0x4] sm:$0xf]
        %v774 = vld [vmem:[%s771 + $0x8] sm:$0xf]
        %v775 = vld [vmem:[%s771 + $0xc] sm:$0xf]
        %v776 = vld [vmem:[%s771 + $0x10] sm:$0xf]
        %v777 = vld [vmem:[%s771 + $0x14] sm:$0xf]
        %v778 = vld [vmem:[%s771 + $0x18] sm:$0xf]
        %v779 = vld [vmem:[%s771 + $0x1c] sm:$0xf]
        %v780 = vld [vmem:[%s771 + $0x20] sm:$0xf]
        %v781 = vld [vmem:[%s771 + $0x24] sm:$0xf]
        %v782 = vld [vmem:[%s771 + $0x28] sm:$0xf]
        %v783 = vld [vmem:[%s771 + $0x2c] sm:$0xf]
        %v784 = vld [vmem:[%s771 + $0x30] sm:$0xf]
        %v785 = vld [vmem:[%s771 + $0x34] sm:$0xf]
        %v786 = vld [vmem:[%s771 + $0x38] sm:$0xf]
        %v787 = vld [vmem:[%s771 + $0x3c] sm:$0xf]
        %s788 = scalar_lea.vmem %s6, 2
        %v789 = vld [vmem:[%s788] sm:$0x1]
        %v791 = vlaneseq
        %v792 = vshrl.u32 %v791, 7
        %v793 = vsub.s32 0, %v792
        %v794 = vrot.slane %v789, %v793
        %v812 = vunpack.c.l.b16 %v772
        %v813 = vunpack.c.l.b16 %v773
        %v814 = vunpack.c.l.b16 %v774
        %v815 = vunpack.c.l.b16 %v775
        %v816 = vunpack.c.l.b16 %v776
        %v817 = vunpack.c.l.b16 %v777
        %v818 = vunpack.c.l.b16 %v778
        %v819 = vunpack.c.l.b16 %v779
        %v820 = vunpack.c.l.b16 %v780
        %v821 = vunpack.c.l.b16 %v781
        %v822 = vunpack.c.l.b16 %v782
        %v823 = vunpack.c.l.b16 %v783
        %v824 = vunpack.c.l.b16 %v784
        %v825 = vunpack.c.l.b16 %v785
        %v826 = vunpack.c.l.b16 %v786
        %v827 = vunpack.c.l.b16 %v787
        %v828 = vpack.c.b16 %v813, %v812
        %v829 = vpack.c.b16 %v815, %v814
        %v830 = vpack.c.b16 %v817, %v816
        %v831 = vpack.c.b16 %v819, %v818
        %v832 = vpack.c.b16 %v821, %v820
        %v833 = vpack.c.b16 %v823, %v822
        %v834 = vpack.c.b16 %v825, %v824
        %v835 = vpack.c.b16 %v827, %v826
        %844 = vmatprep.subr.bf16.mxu0 0
        %845 = vmatpush1.bf16.msra.mxu0 %v835
        %846 = vmatprep.subr.bf16.mxu0 0
        %847 = vmatpush1.bf16.msra.mxu0 %v834
        %848 = vmatprep.subr.bf16.mxu0 0
        %849 = vmatpush1.bf16.msra.mxu0 %v833
        %850 = vmatprep.subr.bf16.mxu0 0
        %851 = vmatpush1.bf16.msra.mxu0 %v832
        %852 = vmatprep.subr.bf16.mxu0 0
        %853 = vmatpush1.bf16.msra.mxu0 %v831
        %854 = vmatprep.subr.bf16.mxu0 0
        %855 = vmatpush1.bf16.msra.mxu0 %v830
        %856 = vmatprep.subr.bf16.mxu0 0
        %857 = vmatpush1.bf16.msra.mxu0 %v829
        %858 = vmatprep.subr.bf16.mxu0 0
        %859 = vmatpush1.bf16.msra.mxu0 %v828
        %860 = vmatprep.subr.bf16.mxu0 0
        %861 = vmatpush2.bf16.msra.mxu0 0
        %862 = vmatprep.subr.bf16.mxu0 0
        %863 = vmatpush2.bf16.msra.mxu0 0
        %864 = vmatprep.subr.bf16.mxu0 0
        %865 = vmatpush2.bf16.msra.mxu0 0
        %866 = vmatprep.subr.bf16.mxu0 0
        %867 = vmatpush2.bf16.msra.mxu0 0
        %868 = vmatprep.subr.bf16.mxu0 0
        %869 = vmatpush2.bf16.msra.mxu0 0
        %870 = vmatprep.subr.bf16.mxu0 0
        %871 = vmatpush2.bf16.msra.mxu0 0
        %872 = vmatprep.subr.bf16.mxu0 0
        %873 = vmatpush2.bf16.msra.mxu0 0
        %874 = vmatprep.subr.bf16.mxu0 0
        %875 = vmatpush2.bf16.msra.mxu0 0
        %876 = vmatprep.mubr.bf16.mxu0 0
        %877 = vmatmul.mubr.bf16.gmra.mxu0 %v770
        %v878 = vpop.f32.mrf.mxu0
        %v879 = vadd.f32 %v794, %v878
        %v880 = vpop.f32.mrf.mxu0
        %v881 = vpop.f32.mrf.mxu0
        %v882 = vpop.f32.mrf.mxu0
        %883 = vdwg.mxu0
        %vm884 = vcmp.gt.f32.partialorder %v879, 0.0
        %v885 = vmul.f32 %v879, 0.01
        %v886 = vsel %vm884, %v879, %v885
        %v887 = vpack.c.bf16 %v886, %v886
        %s888 = scalar_lea.vmem [#allocation9], 128
        %v889 = vld [vmem:[%s888] sm:$0xf]
        %v890 = vld [vmem:[%s888 + $0x4] sm:$0xf]
        %v891 = vld [vmem:[%s888 + $0x8] sm:$0xf]
        %v892 = vld [vmem:[%s888 + $0xc] sm:$0xf]
        %v893 = vld [vmem:[%s888 + $0x10] sm:$0xf]
        %v894 = vld [vmem:[%s888 + $0x14] sm:$0xf]
        %v895 = vld [vmem:[%s888 + $0x18] sm:$0xf]
        %v896 = vld [vmem:[%s888 + $0x1c] sm:$0xf]
        %v897 = vld [vmem:[%s888 + $0x20] sm:$0xf]
        %v898 = vld [vmem:[%s888 + $0x24] sm:$0xf]
        %v899 = vld [vmem:[%s888 + $0x28] sm:$0xf]
        %v900 = vld [vmem:[%s888 + $0x2c] sm:$0xf]
        %v901 = vld [vmem:[%s888 + $0x30] sm:$0xf]
        %v902 = vld [vmem:[%s888 + $0x34] sm:$0xf]
        %v903 = vld [vmem:[%s888 + $0x38] sm:$0xf]
        %v904 = vld [vmem:[%s888 + $0x3c] sm:$0xf]
        %s905 = scalar_lea.vmem %s6, 3
        %v906 = vld [vmem:[%s905] sm:$0x1]
        %v908 = vlaneseq
        %v909 = vshrl.u32 %v908, 7
        %v910 = vsub.s32 0, %v909
        %v911 = vrot.slane %v906, %v910
        %v929 = vunpack.c.l.b16 %v889
        %v930 = vunpack.c.l.b16 %v890
        %v931 = vunpack.c.l.b16 %v891
        %v932 = vunpack.c.l.b16 %v892
        %v933 = vunpack.c.l.b16 %v893
        %v934 = vunpack.c.l.b16 %v894
        %v935 = vunpack.c.l.b16 %v895
        %v936 = vunpack.c.l.b16 %v896
        %v937 = vunpack.c.l.b16 %v897
        %v938 = vunpack.c.l.b16 %v898
        %v939 = vunpack.c.l.b16 %v899
        %v940 = vunpack.c.l.b16 %v900
        %v941 = vunpack.c.l.b16 %v901
        %v942 = vunpack.c.l.b16 %v902
        %v943 = vunpack.c.l.b16 %v903
        %v944 = vunpack.c.l.b16 %v904
        %v945 = vpack.c.b16 %v930, %v929
        %v946 = vpack.c.b16 %v932, %v931
        %v947 = vpack.c.b16 %v934, %v933
        %v948 = vpack.c.b16 %v936, %v935
        %v949 = vpack.c.b16 %v938, %v937
        %v950 = vpack.c.b16 %v940, %v939
        %v951 = vpack.c.b16 %v942, %v941
        %v952 = vpack.c.b16 %v944, %v943
        %961 = vmatprep.subr.bf16.mxu0 0
        %962 = vmatpush1.bf16.msra.mxu0 %v952
        %963 = vmatprep.subr.bf16.mxu0 0
        %964 = vmatpush1.bf16.msra.mxu0 %v951
        %965 = vmatprep.subr.bf16.mxu0 0
        %966 = vmatpush1.bf16.msra.mxu0 %v950
        %967 = vmatprep.subr.bf16.mxu0 0
        %968 = vmatpush1.bf16.msra.mxu0 %v949
        %969 = vmatprep.subr.bf16.mxu0 0
        %970 = vmatpush1.bf16.msra.mxu0 %v948
        %971 = vmatprep.subr.bf16.mxu0 0
        %972 = vmatpush1.bf16.msra.mxu0 %v947
        %973 = vmatprep.subr.bf16.mxu0 0
        %974 = vmatpush1.bf16.msra.mxu0 %v946
        %975 = vmatprep.subr.bf16.mxu0 0
        %976 = vmatpush1.bf16.msra.mxu0 %v945
        %977 = vmatprep.subr.bf16.mxu0 0
        %978 = vmatpush2.bf16.msra.mxu0 0
        %979 = vmatprep.subr.bf16.mxu0 0
        %980 = vmatpush2.bf16.msra.mxu0 0
        %981 = vmatprep.subr.bf16.mxu0 0
        %982 = vmatpush2.bf16.msra.mxu0 0
        %983 = vmatprep.subr.bf16.mxu0 0
        %984 = vmatpush2.bf16.msra.mxu0 0
        %985 = vmatprep.subr.bf16.mxu0 0
        %986 = vmatpush2.bf16.msra.mxu0 0
        %987 = vmatprep.subr.bf16.mxu0 0
        %988 = vmatpush2.bf16.msra.mxu0 0
        %989 = vmatprep.subr.bf16.mxu0 0
        %990 = vmatpush2.bf16.msra.mxu0 0
        %991 = vmatprep.subr.bf16.mxu0 0
        %992 = vmatpush2.bf16.msra.mxu0 0
        %993 = vmatprep.mubr.bf16.mxu0 0
        %994 = vmatmul.mubr.bf16.gmra.mxu0 %v887
        %v995 = vpop.f32.mrf.mxu0
        %v996 = vadd.f32 %v911, %v995
        %v997 = vpop.f32.mrf.mxu0
        %v998 = vpop.f32.mrf.mxu0
        %v999 = vpop.f32.mrf.mxu0
        %1000 = vdwg.mxu0
        %vm1001 = vcmp.gt.f32.partialorder %v996, 0.0
        %v1002 = vmul.f32 %v996, 0.01
        %v1003 = vsel %vm1001, %v996, %v1002
        %v1004 = vpack.c.bf16 %v1003, %v1003
        %s1005 = scalar_lea.vmem [#allocation9], 192
        %v1006 = vld [vmem:[%s1005] sm:$0xf]
        %v1007 = vld [vmem:[%s1005 + $0x4] sm:$0xf]
        %v1008 = vld [vmem:[%s1005 + $0x8] sm:$0xf]
        %v1009 = vld [vmem:[%s1005 + $0xc] sm:$0xf]
        %v1010 = vld [vmem:[%s1005 + $0x10] sm:$0xf]
        %v1011 = vld [vmem:[%s1005 + $0x14] sm:$0xf]
        %v1012 = vld [vmem:[%s1005 + $0x18] sm:$0xf]
        %v1013 = vld [vmem:[%s1005 + $0x1c] sm:$0xf]
        %v1014 = vld [vmem:[%s1005 + $0x20] sm:$0xf]
        %v1015 = vld [vmem:[%s1005 + $0x24] sm:$0xf]
        %v1016 = vld [vmem:[%s1005 + $0x28] sm:$0xf]
        %v1017 = vld [vmem:[%s1005 + $0x2c] sm:$0xf]
        %v1018 = vld [vmem:[%s1005 + $0x30] sm:$0xf]
        %v1019 = vld [vmem:[%s1005 + $0x34] sm:$0xf]
        %v1020 = vld [vmem:[%s1005 + $0x38] sm:$0xf]
        %v1021 = vld [vmem:[%s1005 + $0x3c] sm:$0xf]
        %s1022 = scalar_lea.vmem %s6, 4
        %v1023 = vld [vmem:[%s1022] sm:$0x1]
        %v1025 = vlaneseq
        %v1026 = vshrl.u32 %v1025, 7
        %v1027 = vsub.s32 0, %v1026
        %v1028 = vrot.slane %v1023, %v1027
        %v1046 = vunpack.c.l.b16 %v1006
        %v1047 = vunpack.c.l.b16 %v1007
        %v1048 = vunpack.c.l.b16 %v1008
        %v1049 = vunpack.c.l.b16 %v1009
        %v1050 = vunpack.c.l.b16 %v1010
        %v1051 = vunpack.c.l.b16 %v1011
        %v1052 = vunpack.c.l.b16 %v1012
        %v1053 = vunpack.c.l.b16 %v1013
        %v1054 = vunpack.c.l.b16 %v1014
        %v1055 = vunpack.c.l.b16 %v1015
        %v1056 = vunpack.c.l.b16 %v1016
        %v1057 = vunpack.c.l.b16 %v1017
        %v1058 = vunpack.c.l.b16 %v1018
        %v1059 = vunpack.c.l.b16 %v1019
        %v1060 = vunpack.c.l.b16 %v1020
        %v1061 = vunpack.c.l.b16 %v1021
        %v1062 = vpack.c.b16 %v1047, %v1046
        %v1063 = vpack.c.b16 %v1049, %v1048
        %v1064 = vpack.c.b16 %v1051, %v1050
        %v1065 = vpack.c.b16 %v1053, %v1052
        %v1066 = vpack.c.b16 %v1055, %v1054
        %v1067 = vpack.c.b16 %v1057, %v1056
        %v1068 = vpack.c.b16 %v1059, %v1058
        %v1069 = vpack.c.b16 %v1061, %v1060
        %1078 = vmatprep.subr.bf16.mxu0 0
        %1079 = vmatpush1.bf16.msra.mxu0 %v1069
        %1080 = vmatprep.subr.bf16.mxu0 0
        %1081 = vmatpush1.bf16.msra.mxu0 %v1068
        %1082 = vmatprep.subr.bf16.mxu0 0
        %1083 = vmatpush1.bf16.msra.mxu0 %v1067
        %1084 = vmatprep.subr.bf16.mxu0 0
        %1085 = vmatpush1.bf16.msra.mxu0 %v1066
        %1086 = vmatprep.subr.bf16.mxu0 0
        %1087 = vmatpush1.bf16.msra.mxu0 %v1065
        %1088 = vmatprep.subr.bf16.mxu0 0
        %1089 = vmatpush1.bf16.msra.mxu0 %v1064
        %1090 = vmatprep.subr.bf16.mxu0 0
        %1091 = vmatpush1.bf16.msra.mxu0 %v1063
        %1092 = vmatprep.subr.bf16.mxu0 0
        %1093 = vmatpush1.bf16.msra.mxu0 %v1062
        %1094 = vmatprep.subr.bf16.mxu0 0
        %1095 = vmatpush2.bf16.msra.mxu0 0
        %1096 = vmatprep.subr.bf16.mxu0 0
        %1097 = vmatpush2.bf16.msra.mxu0 0
        %1098 = vmatprep.subr.bf16.mxu0 0
        %1099 = vmatpush2.bf16.msra.mxu0 0
        %1100 = vmatprep.subr.bf16.mxu0 0
        %1101 = vmatpush2.bf16.msra.mxu0 0
        %1102 = vmatprep.subr.bf16.mxu0 0
        %1103 = vmatpush2.bf16.msra.mxu0 0
        %1104 = vmatprep.subr.bf16.mxu0 0
        %1105 = vmatpush2.bf16.msra.mxu0 0
        %1106 = vmatprep.subr.bf16.mxu0 0
        %1107 = vmatpush2.bf16.msra.mxu0 0
        %1108 = vmatprep.subr.bf16.mxu0 0
        %1109 = vmatpush2.bf16.msra.mxu0 0
        %1110 = vmatprep.mubr.bf16.mxu0 0
        %1111 = vmatmul.mubr.bf16.gmra.mxu0 %v1004
        %v1112 = vpop.f32.mrf.mxu0
        %v1113 = vadd.f32 %v1028, %v1112
        %v1114 = vpop.f32.mrf.mxu0
        %v1115 = vpop.f32.mrf.mxu0
        %v1116 = vpop.f32.mrf.mxu0
        %1117 = vdwg.mxu0
        %vm1118 = vcmp.gt.f32.partialorder %v1113, 0.0
        %v1119 = vmul.f32 %v1113, 0.01
        %v1120 = vsel %vm1118, %v1113, %v1119
        %v1121 = vpack.c.bf16 %v1120, %v1120
        %s1122 = scalar_lea.vmem [#allocation9], 256
        %v1123 = vld [vmem:[%s1122] sm:$0xf]
        %v1124 = vld [vmem:[%s1122 + $0x4] sm:$0xf]
        %v1125 = vld [vmem:[%s1122 + $0x8] sm:$0xf]
        %v1126 = vld [vmem:[%s1122 + $0xc] sm:$0xf]
        %v1127 = vld [vmem:[%s1122 + $0x10] sm:$0xf]
        %v1128 = vld [vmem:[%s1122 + $0x14] sm:$0xf]
        %v1129 = vld [vmem:[%s1122 + $0x18] sm:$0xf]
        %v1130 = vld [vmem:[%s1122 + $0x1c] sm:$0xf]
        %v1131 = vld [vmem:[%s1122 + $0x20] sm:$0xf]
        %v1132 = vld [vmem:[%s1122 + $0x24] sm:$0xf]
        %v1133 = vld [vmem:[%s1122 + $0x28] sm:$0xf]
        %v1134 = vld [vmem:[%s1122 + $0x2c] sm:$0xf]
        %v1135 = vld [vmem:[%s1122 + $0x30] sm:$0xf]
        %v1136 = vld [vmem:[%s1122 + $0x34] sm:$0xf]
        %v1137 = vld [vmem:[%s1122 + $0x38] sm:$0xf]
        %v1138 = vld [vmem:[%s1122 + $0x3c] sm:$0xf]
        %s1139 = scalar_lea.vmem %s6, 5
        %v1140 = vld [vmem:[%s1139] sm:$0x1]
        %v1142 = vlaneseq
        %v1143 = vshrl.u32 %v1142, 7
        %v1144 = vsub.s32 0, %v1143
        %v1145 = vrot.slane %v1140, %v1144
        %v1163 = vunpack.c.l.b16 %v1123
        %v1164 = vunpack.c.l.b16 %v1124
        %v1165 = vunpack.c.l.b16 %v1125
        %v1166 = vunpack.c.l.b16 %v1126
        %v1167 = vunpack.c.l.b16 %v1127
        %v1168 = vunpack.c.l.b16 %v1128
        %v1169 = vunpack.c.l.b16 %v1129
        %v1170 = vunpack.c.l.b16 %v1130
        %v1171 = vunpack.c.l.b16 %v1131
        %v1172 = vunpack.c.l.b16 %v1132
        %v1173 = vunpack.c.l.b16 %v1133
        %v1174 = vunpack.c.l.b16 %v1134
        %v1175 = vunpack.c.l.b16 %v1135
        %v1176 = vunpack.c.l.b16 %v1136
        %v1177 = vunpack.c.l.b16 %v1137
        %v1178 = vunpack.c.l.b16 %v1138
        %v1179 = vpack.c.b16 %v1164, %v1163
        %v1180 = vpack.c.b16 %v1166, %v1165
        %v1181 = vpack.c.b16 %v1168, %v1167
        %v1182 = vpack.c.b16 %v1170, %v1169
        %v1183 = vpack.c.b16 %v1172, %v1171
        %v1184 = vpack.c.b16 %v1174, %v1173
        %v1185 = vpack.c.b16 %v1176, %v1175
        %v1186 = vpack.c.b16 %v1178, %v1177
        %1195 = vmatprep.subr.bf16.mxu0 0
        %1196 = vmatpush1.bf16.msra.mxu0 %v1186
        %1197 = vmatprep.subr.bf16.mxu0 0
        %1198 = vmatpush1.bf16.msra.mxu0 %v1185
        %1199 = vmatprep.subr.bf16.mxu0 0
        %1200 = vmatpush1.bf16.msra.mxu0 %v1184
        %1201 = vmatprep.subr.bf16.mxu0 0
        %1202 = vmatpush1.bf16.msra.mxu0 %v1183
        %1203 = vmatprep.subr.bf16.mxu0 0
        %1204 = vmatpush1.bf16.msra.mxu0 %v1182
        %1205 = vmatprep.subr.bf16.mxu0 0
        %1206 = vmatpush1.bf16.msra.mxu0 %v1181
        %1207 = vmatprep.subr.bf16.mxu0 0
        %1208 = vmatpush1.bf16.msra.mxu0 %v1180
        %1209 = vmatprep.subr.bf16.mxu0 0
        %1210 = vmatpush1.bf16.msra.mxu0 %v1179
        %1211 = vmatprep.subr.bf16.mxu0 0
        %1212 = vmatpush2.bf16.msra.mxu0 0
        %1213 = vmatprep.subr.bf16.mxu0 0
        %1214 = vmatpush2.bf16.msra.mxu0 0
        %1215 = vmatprep.subr.bf16.mxu0 0
        %1216 = vmatpush2.bf16.msra.mxu0 0
        %1217 = vmatprep.subr.bf16.mxu0 0
        %1218 = vmatpush2.bf16.msra.mxu0 0
        %1219 = vmatprep.subr.bf16.mxu0 0
        %1220 = vmatpush2.bf16.msra.mxu0 0
        %1221 = vmatprep.subr.bf16.mxu0 0
        %1222 = vmatpush2.bf16.msra.mxu0 0
        %1223 = vmatprep.subr.bf16.mxu0 0
        %1224 = vmatpush2.bf16.msra.mxu0 0
        %1225 = vmatprep.subr.bf16.mxu0 0
        %1226 = vmatpush2.bf16.msra.mxu0 0
        %1227 = vmatprep.mubr.bf16.mxu0 0
        %1228 = vmatmul.mubr.bf16.gmra.mxu0 %v1121
        %v1229 = vpop.f32.mrf.mxu0
        %v1230 = vadd.f32 %v1145, %v1229
        %v1231 = vpop.f32.mrf.mxu0
        %v1232 = vpop.f32.mrf.mxu0
        %v1233 = vpop.f32.mrf.mxu0
        %1234 = vdwg.mxu0
        %vm1235 = vcmp.gt.f32.partialorder %v1230, 0.0
        %v1236 = vmul.f32 %v1230, 0.01
        %v1237 = vsel %vm1235, %v1230, %v1236
        %v1238 = vpack.c.bf16 %v1237, %v1237
        %s1239 = scalar_lea.vmem [#allocation9], 320
        %v1240 = vld [vmem:[%s1239] sm:$0xf]
        %v1241 = vld [vmem:[%s1239 + $0x4] sm:$0xf]
        %v1242 = vld [vmem:[%s1239 + $0x8] sm:$0xf]
        %v1243 = vld [vmem:[%s1239 + $0xc] sm:$0xf]
        %v1244 = vld [vmem:[%s1239 + $0x10] sm:$0xf]
        %v1245 = vld [vmem:[%s1239 + $0x14] sm:$0xf]
        %v1246 = vld [vmem:[%s1239 + $0x18] sm:$0xf]
        %v1247 = vld [vmem:[%s1239 + $0x1c] sm:$0xf]
        %v1248 = vld [vmem:[%s1239 + $0x20] sm:$0xf]
        %v1249 = vld [vmem:[%s1239 + $0x24] sm:$0xf]
        %v1250 = vld [vmem:[%s1239 + $0x28] sm:$0xf]
        %v1251 = vld [vmem:[%s1239 + $0x2c] sm:$0xf]
        %v1252 = vld [vmem:[%s1239 + $0x30] sm:$0xf]
        %v1253 = vld [vmem:[%s1239 + $0x34] sm:$0xf]
        %v1254 = vld [vmem:[%s1239 + $0x38] sm:$0xf]
        %v1255 = vld [vmem:[%s1239 + $0x3c] sm:$0xf]
        %s1256 = scalar_lea.vmem %s6, 6
        %v1257 = vld [vmem:[%s1256] sm:$0x1]
        %v1259 = vlaneseq
        %v1260 = vshrl.u32 %v1259, 7
        %v1261 = vsub.s32 0, %v1260
        %v1262 = vrot.slane %v1257, %v1261
        %v1280 = vunpack.c.l.b16 %v1240
        %v1281 = vunpack.c.l.b16 %v1241
        %v1282 = vunpack.c.l.b16 %v1242
        %v1283 = vunpack.c.l.b16 %v1243
        %v1284 = vunpack.c.l.b16 %v1244
        %v1285 = vunpack.c.l.b16 %v1245
        %v1286 = vunpack.c.l.b16 %v1246
        %v1287 = vunpack.c.l.b16 %v1247
        %v1288 = vunpack.c.l.b16 %v1248
        %v1289 = vunpack.c.l.b16 %v1249
        %v1290 = vunpack.c.l.b16 %v1250
        %v1291 = vunpack.c.l.b16 %v1251
        %v1292 = vunpack.c.l.b16 %v1252
        %v1293 = vunpack.c.l.b16 %v1253
        %v1294 = vunpack.c.l.b16 %v1254
        %v1295 = vunpack.c.l.b16 %v1255
        %v1296 = vpack.c.b16 %v1281, %v1280
        %v1297 = vpack.c.b16 %v1283, %v1282
        %v1298 = vpack.c.b16 %v1285, %v1284
        %v1299 = vpack.c.b16 %v1287, %v1286
        %v1300 = vpack.c.b16 %v1289, %v1288
        %v1301 = vpack.c.b16 %v1291, %v1290
        %v1302 = vpack.c.b16 %v1293, %v1292
        %v1303 = vpack.c.b16 %v1295, %v1294
        %1312 = vmatprep.subr.bf16.mxu0 0
        %1313 = vmatpush1.bf16.msra.mxu0 %v1303
        %1314 = vmatprep.subr.bf16.mxu0 0
        %1315 = vmatpush1.bf16.msra.mxu0 %v1302
        %1316 = vmatprep.subr.bf16.mxu0 0
        %1317 = vmatpush1.bf16.msra.mxu0 %v1301
        %1318 = vmatprep.subr.bf16.mxu0 0
        %1319 = vmatpush1.bf16.msra.mxu0 %v1300
        %1320 = vmatprep.subr.bf16.mxu0 0
        %1321 = vmatpush1.bf16.msra.mxu0 %v1299
        %1322 = vmatprep.subr.bf16.mxu0 0
        %1323 = vmatpush1.bf16.msra.mxu0 %v1298
        %1324 = vmatprep.subr.bf16.mxu0 0
        %1325 = vmatpush1.bf16.msra.mxu0 %v1297
        %1326 = vmatprep.subr.bf16.mxu0 0
        %1327 = vmatpush1.bf16.msra.mxu0 %v1296
        %1328 = vmatprep.subr.bf16.mxu0 0
        %1329 = vmatpush2.bf16.msra.mxu0 0
        %1330 = vmatprep.subr.bf16.mxu0 0
        %1331 = vmatpush2.bf16.msra.mxu0 0
        %1332 = vmatprep.subr.bf16.mxu0 0
        %1333 = vmatpush2.bf16.msra.mxu0 0
        %1334 = vmatprep.subr.bf16.mxu0 0
        %1335 = vmatpush2.bf16.msra.mxu0 0
        %1336 = vmatprep.subr.bf16.mxu0 0
        %1337 = vmatpush2.bf16.msra.mxu0 0
        %1338 = vmatprep.subr.bf16.mxu0 0
        %1339 = vmatpush2.bf16.msra.mxu0 0
        %1340 = vmatprep.subr.bf16.mxu0 0
        %1341 = vmatpush2.bf16.msra.mxu0 0
        %1342 = vmatprep.subr.bf16.mxu0 0
        %1343 = vmatpush2.bf16.msra.mxu0 0
        %1344 = vmatprep.mubr.bf16.mxu0 0
        %1345 = vmatmul.mubr.bf16.gmra.mxu0 %v1238
        %v1346 = vpop.f32.mrf.mxu0
        %v1347 = vadd.f32 %v1262, %v1346
        %v1348 = vpop.f32.mrf.mxu0
        %v1349 = vpop.f32.mrf.mxu0
        %v1350 = vpop.f32.mrf.mxu0
        %1351 = vdwg.mxu0
        %v1352 = vmax.f32 %v1347, 0.0
        %v1353 = vlaneseq
        %v1354 = vshrl.u32 %v1353, 7
        %v1355 = vlaneseq
        %v1356 = vand.u32 %v1355, 127
        %v1357 = vstv %s317
        %vm1358 = vcmp.lt.s32.totalorder %v1354, %v1357
        %vm1359 = vcmp.lt.s32.totalorder %v1356, 4
        %vm1360 = vmand %vm1358, %vm1359
        %v1361 = vsel %vm1360, %v1352, -1e+30
        %1362 = vmax.xlane.f32.xlu0 %v1361
        %v1363 = vpop.xlane.xlu0 %1362
        %v1364 = vrot.slane %v1363, 4
        %v1365 = vmax.f32 %v1363, %v1364
        %v1366 = vrot.slane %v1365, 2
        %v1367 = vmax.f32 %v1365, %v1366
        %v1368 = vrot.slane %v1367, 1
        %v1369 = vmax.f32 %v1367, %v1368
        %v1370 = vsub.f32 %v1361, %v1369
        %v1371 = vmul.f32 %v1370, 1.442695
        %v1372 = vpow.pop %v1371
        %v1373 = vsel %vm1360, %v1372, 0.0
        %1374 = vadd.xlane.f32.xlu0 %v1373
        %v1375 = vpop.xlane.xlu0 %1374
        %v1376 = vrot.slane %v1375, 4
        %v1377 = vadd.f32 %v1375, %v1376
        %v1378 = vrot.slane %v1377, 2
        %v1379 = vadd.f32 %v1377, %v1378
        %v1380 = vrot.slane %v1379, 1
        %v1381 = vadd.f32 %v1379, %v1380
        %v1382 = vmax.f32 %v1381, 1e-30
        %v1383 = vrcp.pop %v1382
        %v1384 = vmul.f32 %v1373, %v1383
        %vm1385 = vcmask 31744
        %1386 = vst.msk [vmem:[%s315] sm:$0xff] %vm1385, %v1384
        %p1387 = scmp.lt.s32.totalorder %s27, 1
        %s1388 = scalar_select %p1387, %s27, 1
        %s1389 = smul.addr %s1388, 8
        %s1390 = scalar_lea.vmem %s7, %s1389
        // Predicated region
        $region61: #{tpu_custom_call.1} parent=43 // pred_check
          %p1391 = pneg %p176
        $region62: #{tpu_custom_call.1} parent=43 // pred_check_branch
          %1393 = sbr.rel (%p1391) target = $region64
        $region63: #{tpu_custom_call.1} parent=43 // pred_region
          _
        $region64: #{tpu_custom_call.1} parent=43 // pred_fallthru
          _
      $region44: #{tpu_custom_call.1} parent=5 // pred_fallthru
        _
      %p1394 = scmp.le.s32.totalorder 2, %s22
      // Predicated region
      $region65: #{tpu_custom_call.1} parent=5 // pred_check
        %p1395 = pneg %p1394
      $region66: #{tpu_custom_call.1} parent=5 // pred_check_branch
        %1397 = sbr.rel (%p1395) target = $region68
      $region67: #{tpu_custom_call.1} parent=5 // pred_region
        %s1398 = ssub.s32 %s22, 2
        // Predicated region
        $region69: #{tpu_custom_call.1} parent=67 // pred_check
          %p1399 = pneg %p182
        $region70: #{tpu_custom_call.1} parent=67 // pred_check_branch
          %1401 = sbr.rel (%p1399) target = $region72
        $region71: #{tpu_custom_call.1} parent=67 // pred_region
          %p1402 = scmp.lt.s32.totalorder %s28, 1
          %s1403 = scalar_select %p1402, %s28, 1
          %s1404 = smul.addr %s1403, 8
          %s1405 = scalar_lea.vmem %s7, %s1404
        $region72: #{tpu_custom_call.1} parent=67 // pred_fallthru
          _
      $region68: #{tpu_custom_call.1} parent=5 // pred_fallthru
        _
    $region6: #{tpu_custom_call.1} parent=1 // loop_footer
      %s26 = sadd.s32 1, %s22
    $region7: #{tpu_custom_call.1} parent=1 // loop_footer_branch
      %21 = sbr.rel target = $region3
    $region8: #{tpu_custom_call.1} parent=1 // loop_exit
      _
    %1406 = vsyncpa [#allocation5], 1
    %s1407 = scalar_lea.sflag [#allocation5], 1
    %1408 = vsyncpa %s1407, 1
    %1409 = vsyncpa [#allocation7], 1
    %1410 = vsyncpa [#allocation10], 1

</llo_original>
